<compile_context>
chip_gen: v6e
topology: v6e:2x2x1
jax: 0.10.0
libtpu: 0.0.40
codegen_flags: <defaults>
</compile_context>

<pallas_src>
import functools
from typing import NamedTuple, Tuple

import jax
import jax.numpy as jnp
from jax.experimental import pallas as pl
from jax.experimental.pallas import tpu as pltpu


def _round_up(n, m):
    return ((n + m - 1) // m) * m


# ----------------------------------------------------------------------------
# Kernel
# ----------------------------------------------------------------------------
def _fused_mlp_kernel(*refs, n_layers, mxu_dtype):
    """Fused MLP on one batch tile.

    refs = (x_ref, w1_ref, b1_ref, ..., wL_ref, bL_ref, out_ref)
      x_ref : (tm, D0p)       activations, f32
      wi_ref: (D(i-1)p, Dip)  weights (bf16 by default), whole array, VMEM-resident
      bi_ref: (1, Dip)        bias, f32
      out_ref: (tm, DLp)      pre-ReLU output of the LAST layer that is run
                              (final Linear output, or the last hidden when the
                              caller asked for ret_last_hid)
    """
    x_ref = refs[0]
    out_ref = refs[-1]
    wb = refs[1:-1]

    x = x_ref[...]                                   # f32 activations in vregs
    for i in range(n_layers):
        w = wb[2 * i][...]                           # already in mxu_dtype
        b = wb[2 * i + 1][...]
        # MXU matmul with f32 accumulate; bias add in f32 on the VPU.
        y = jnp.dot(x.astype(mxu_dtype), w, preferred_element_type=jnp.float32)
        y = y + b
        if i != n_layers - 1:
            y = jnp.maximum(y, 0.0)                  # ReLU in f32 (VPU)
        # TODO(synk): on v6e/v7x keep inter-layer activations in bf16 after the
        # ReLU (bf16 VALU) instead of casting f32->bf16 each layer; keep the
        # f32 epilogue on v5e (no bf16 VPU).
        x = y
    out_ref[...] = x.astype(out_ref.dtype)


# ----------------------------------------------------------------------------
# Parameter preparation (hoisted out of the per-call path)
# ----------------------------------------------------------------------------
class PreparedParams(NamedTuple):
    weights: Tuple[jax.Array, ...]   # padded, cast to MXU dtype, (Kp, Np)
    biases: Tuple[jax.Array, ...]    # padded, f32, (1, Np)
    dims: Tuple[int, ...]            # true feature dims [D0, D1, ..., DL]
    dims_pad: Tuple[int, ...]        # padded feature dims
    mxu_dtype: jnp.dtype


def prepare_params(params, *, use_bf16_mxu=True):
    """Pad/cast weights once.  params: list of (w:(Din,Dout), b:(Dout,))."""
    assert len(params) >= 1
    mxu_dtype = jnp.bfloat16 if use_bf16_mxu else jnp.float32
    dims = [params[0][0].shape[0]] + [w.shape[1] for (w, _) in params]
    # Layer-0 K only needs sublane packing (8 f32 / 16 bf16); every activation
    # width (lane dim + next layer's K) is padded to 128 for dense MXU columns
    # and unmasked stores.
    k_align = 16 if use_bf16_mxu else 8
    dims_pad = [_round_up(dims[0], k_align)] + [_round_up(d, 128) for d in dims[1:]]

    weights, biases = [], []
    for li, (w, b) in enumerate(params):
        kp, np_ = dims_pad[li], dims_pad[li + 1]
        w_p = jnp.zeros((kp, np_), jnp.float32)
        w_p = w_p.at[:w.shape[0], :w.shape[1]].set(w.astype(jnp.float32))
        w_p = w_p.astype(mxu_dtype)                  # bf16 halves weight HBM/VMEM
        # TODO(synk): on v7x optionally store weights in fp8 (MXU-native) with
        # f32 accumulate to further relieve the 64 MiB VMEM ceiling.
        b_p = jnp.zeros((1, np_), jnp.float32)
        b_p = b_p.at[0, :b.shape[0]].set(b.astype(jnp.float32))
        weights.append(w_p)
        biases.append(b_p)
    return PreparedParams(tuple(weights), tuple(biases), tuple(dims),
                          tuple(dims_pad), mxu_dtype)


# ----------------------------------------------------------------------------
# Launch
# ----------------------------------------------------------------------------
def _launch(x_p, prepared, n_run, tm, m_pad, *, single_buffer_weights):
    dims_pad = prepared.dims_pad
    d0p, dnp = dims_pad[0], dims_pad[n_run]

    in_specs = [pl.BlockSpec((tm, d0p), lambda i: (i, 0))]
    flat_inputs = [x_p]
    wb_mode = pl.Buffered(1) if single_buffer_weights else None
    for li in range(n_run):
        kp, np_ = dims_pad[li], dims_pad[li + 1]
        flat_inputs += [prepared.weights[li], prepared.biases[li]]
        if wb_mode is not None:
            # Grid-invariant blocks: single-buffer to halve resident weight VMEM.
            in_specs += [
                pl.BlockSpec((kp, np_), lambda i: (0, 0), pipeline_mode=wb_mode),
                pl.BlockSpec((1, np_), lambda i: (0, 0), pipeline_mode=wb_mode),
            ]
        else:
            in_specs += [
                pl.BlockSpec((kp, np_), lambda i: (0, 0)),
                pl.BlockSpec((1, np_), lambda i: (0, 0)),
            ]
        # TODO(synk): for very large hidden dims (weights that blow v7x's 64 MiB
        # VMEM) add a trailing "arbitrary" K grid axis with an f32 VMEM
        # accumulator (init/finalize via pl.when) instead of full (K,N) blocks.

    out_shape = jax.ShapeDtypeStruct((m_pad, dnp), jnp.float32)
    out_spec = pl.BlockSpec((tm, dnp), lambda i: (i, 0))
    # TODO(synk): for very large M with narrow true output dims, consider
    # writing only the true columns (masked vst) instead of padding to 128.

    # Explicit VMEM budget: weights+biases (x2 to also cover the fallback
    # double-buffered path) + double-buffered x/out tiles + matmul temporaries,
    # with headroom; capped at v7x's 64 MiB physical VMEM.
    wb_bytes = sum(int(w.size) * w.dtype.itemsize for w in prepared.weights[:n_run])
    wb_bytes += sum(int(b.size) * 4 for b in prepared.biases[:n_run])
    tile_bytes = 2 * (tm * d0p + tm * dnp) * 4
    tmp_bytes = 4 * tm * max(dims_pad[:n_run + 1]) * 4
    vmem_limit = 2 * wb_bytes + tile_bytes + tmp_bytes + (8 << 20)
    vmem_limit = min(max(vmem_limit, 32 << 20), 64 << 20)

    kernel = functools.partial(_fused_mlp_kernel, n_layers=n_run,
                               mxu_dtype=prepared.mxu_dtype)
    return pl.pallas_call(
        kernel,
        out_shape=out_shape,
        grid_spec=pltpu.PrefetchScalarGridSpec(
            num_scalar_prefetch=0,
            grid=(m_pad // tm,),
            in_specs=in_specs,
            out_specs=out_spec,
        ),
        compiler_params=pltpu.CompilerParams(
            dimension_semantics=("parallel",),
            vmem_limit_bytes=int(vmem_limit)),
    )(*flat_inputs)


def meta_model_forward(x, prepared: PreparedParams, ret_last_hid=False, *, tm=None):
    """Mirrors MetaModel.forward(x, ret_last_hid). x: (M, D0)."""
    n_layers = len(prepared.weights)
    if ret_last_hid and n_layers < 2:
        return jnp.zeros((), jnp.float32)            # mirrors the PyTorch `0` default
    # When only the last hidden is requested, the final Linear is never used.
    n_run = n_layers - 1 if ret_last_hid else n_layers

    M, K0 = x.shape
    assert K0 == prepared.dims[0]
    m8 = _round_up(M, 8)

    # Batch tile: for small batches split into >=2 grid steps so v7x's two
    # TensorCores both get work; large batches use 512-row tiles.
    if tm is None:
        if m8 <= 512:
            tm = _round_up(-(-m8 // 2), 8) if m8 >= 16 else m8
        else:
            tm = 512
    tm = _round_up(tm, 8)
    m_pad = _round_up(max(m8, tm), tm)

    # Zero-pad x (padded feature lanes stay exactly zero through the network
    # because padded weight rows/cols and biases are zero; padded batch rows
    # are sliced off below).
    d0p = prepared.dims_pad[0]
    x_p = jnp.zeros((m_pad, d0p), jnp.float32)
    x_p = x_p.at[:M, :K0].set(x.astype(jnp.float32))

    try:
        out_p = _launch(x_p, prepared, n_run, tm, m_pad, single_buffer_weights=True)
    except Exception:
        # TODO(synk): drop this fallback once pl.Buffered(1) is supported everywhere.
        out_p = _launch(x_p, prepared, n_run, tm, m_pad, single_buffer_weights=False)

    return out_p[:M, :prepared.dims[n_run]]


# ----------------------------------------------------------------------------
# Reference + init (for the self-test)
# ----------------------------------------------------------------------------
def init_meta_model_params(hidden_dim_list, key):
    """Deterministic params matching nn.Linear: weight stored transposed (in,out)."""
    params = []
    for i in range(len(hidden_dim_list) - 1):
        fan_in, fan_out = hidden_dim_list[i], hidden_dim_list[i + 1]
        key, kw, kb = jax.random.split(key, 3)
        bound = 1.0 / (fan_in ** 0.5)
        w = jax.random.uniform(kw, (fan_in, fan_out), jnp.float32,
                               minval=-bound, maxval=bound)
        b = jax.random.uniform(kb, (fan_out,), jnp.float32,
                               minval=-bound, maxval=bound)
        params.append((w, b))
    return params


def meta_model_ref(x, params, ret_last_hid=False):
    """Pure-JAX reference for correctness check."""
    n_layers = len(params)
    x_last_hid = jnp.zeros((), jnp.float32)
    for i, (w, b) in enumerate(params):
        x = x @ w + b
        if i == n_layers - 2:
            x_last_hid = x
        if i != n_layers - 1:
            x = jnp.maximum(x, 0.0)
    return x_last_hid if ret_last_hid else x


if __name__ == "__main__":
    hidden_dim_list = [32, 64, 64, 16]   # 3 Linear layers
    batch = 16

    key = jax.random.PRNGKey(0)
    key, kx = jax.random.split(key)
    x = jax.random.normal(kx, (batch, hidden_dim_list[0]), jnp.float32)
    params = init_meta_model_params(hidden_dim_list, key)

    ref_out = meta_model_ref(x, params, ret_last_hid=False)
    ref_hid = meta_model_ref(x, params, ret_last_hid=True)

    # Default path: bf16 MXU (all generations), f32 accumulate + epilogue.
    prepared = prepare_params(params)                # use_bf16_mxu=True default
    out = jax.block_until_ready(meta_model_forward(x, prepared, ret_last_hid=False))
    hid = jax.block_until_ready(meta_model_forward(x, prepared, ret_last_hid=True))
    assert out.shape == (batch, hidden_dim_list[-1])
    assert hid.shape == (batch, hidden_dim_list[-2])
    assert jnp.allclose(out, ref_out, atol=5e-2, rtol=5e-2)
    assert jnp.allclose(hid, ref_hid, atol=5e-2, rtol=5e-2)

    # f32 validation path (exact vs reference).
    prepared_f32 = prepare_params(params, use_bf16_mxu=False)
    out_f32 = jax.block_until_ready(meta_model_forward(x, prepared_f32))
    hid_f32 = jax.block_until_ready(
        meta_model_forward(x, prepared_f32, ret_last_hid=True))
    assert jnp.allclose(out_f32, ref_out, atol=1e-5, rtol=1e-5)
    assert jnp.allclose(hid_f32, ref_hid, atol=1e-5, rtol=1e-5)

    print("KERNEL_OK")
</pallas_src>

<mosaic_0001>
module attributes {stable_mosaic.version = 11 : i64} {
  func.func @_fused_mlp_kernel(%arg0: i32, %arg1: memref<8x32xf32, #tpu.memory_space<vmem>>, %arg2: memref<32x128xbf16, #tpu.memory_space<vmem>>, %arg3: memref<1x128xf32, #tpu.memory_space<vmem>>, %arg4: memref<128x128xbf16, #tpu.memory_space<vmem>>, %arg5: memref<1x128xf32, #tpu.memory_space<vmem>>, %arg6: memref<128x128xbf16, #tpu.memory_space<vmem>>, %arg7: memref<1x128xf32, #tpu.memory_space<vmem>>, %arg8: memref<8x128xf32, #tpu.memory_space<vmem>>) attributes {dimension_semantics = [#tpu.dimension_semantics<parallel>], iteration_bounds = array<i64: 2>, scalar_prefetch = 0 : i64, scratch_operands = 0 : i64, tpu.core_type = #tpu.core_type<tc>, window_params = [{transform_indices = @transform_0, window_bounds = array<i64: 8, 32>}, {pipeline_mode = #tpu.pipeline_mode<synchronous>, transform_indices = @transform_1, window_bounds = array<i64: 32, 128>}, {pipeline_mode = #tpu.pipeline_mode<synchronous>, transform_indices = @transform_2, window_bounds = array<i64: 1, 128>}, {pipeline_mode = #tpu.pipeline_mode<synchronous>, transform_indices = @transform_3, window_bounds = array<i64: 128, 128>}, {pipeline_mode = #tpu.pipeline_mode<synchronous>, transform_indices = @transform_4, window_bounds = array<i64: 1, 128>}, {pipeline_mode = #tpu.pipeline_mode<synchronous>, transform_indices = @transform_5, window_bounds = array<i64: 128, 128>}, {pipeline_mode = #tpu.pipeline_mode<synchronous>, transform_indices = @transform_6, window_bounds = array<i64: 1, 128>}, {transform_indices = @transform_7, window_bounds = array<i64: 8, 128>}]} {
    %c0 = arith.constant 0 : index
    %c0_0 = arith.constant 0 : index
    %0 = vector.load %arg1[%c0, %c0_0] : memref<8x32xf32, #tpu.memory_space<vmem>>, vector<8x32xf32>
    %c0_1 = arith.constant 0 : index
    %c0_2 = arith.constant 0 : index
    %1 = vector.load %arg2[%c0_1, %c0_2] : memref<32x128xbf16, #tpu.memory_space<vmem>>, vector<32x128xbf16>
    %c0_3 = arith.constant 0 : index
    %c0_4 = arith.constant 0 : index
    %2 = vector.load %arg3[%c0_3, %c0_4] : memref<1x128xf32, #tpu.memory_space<vmem>>, vector<1x128xf32>
    %3 = arith.truncf %0 : vector<8x32xf32> to vector<8x32xbf16>
    %cst = arith.constant dense<0.000000e+00> : vector<8x128xf32>
    %4 = tpu.matmul %3, %1, %cst {dimension_numbers = #tpu.dot_dimension_numbers<[1], [0], [0], [1], [0, 0, 1, 1], [], []>} : vector<8x32xbf16>, vector<32x128xbf16>, vector<8x128xf32> -> vector<8x128xf32>
    %5 = vector.broadcast %2 : vector<1x128xf32> to vector<8x128xf32>
    %6 = arith.addf %4, %5 : vector<8x128xf32>
    %cst_5 = arith.constant 0.000000e+00 : f32
    %7 = vector.broadcast %cst_5 : f32 to vector<8x128xf32>
    %8 = arith.maximumf %6, %7 : vector<8x128xf32>
    %c0_6 = arith.constant 0 : index
    %c0_7 = arith.constant 0 : index
    %9 = vector.load %arg4[%c0_6, %c0_7] : memref<128x128xbf16, #tpu.memory_space<vmem>>, vector<128x128xbf16>
    %c0_8 = arith.constant 0 : index
    %c0_9 = arith.constant 0 : index
    %10 = vector.load %arg5[%c0_8, %c0_9] : memref<1x128xf32, #tpu.memory_space<vmem>>, vector<1x128xf32>
    %11 = arith.truncf %8 : vector<8x128xf32> to vector<8x128xbf16>
    %cst_10 = arith.constant dense<0.000000e+00> : vector<8x128xf32>
    %12 = tpu.matmul %11, %9, %cst_10 {dimension_numbers = #tpu.dot_dimension_numbers<[1], [0], [0], [1], [0, 0, 1, 1], [], []>} : vector<8x128xbf16>, vector<128x128xbf16>, vector<8x128xf32> -> vector<8x128xf32>
    %13 = vector.broadcast %10 : vector<1x128xf32> to vector<8x128xf32>
    %14 = arith.addf %12, %13 : vector<8x128xf32>
    %cst_11 = arith.constant 0.000000e+00 : f32
    %15 = vector.broadcast %cst_11 : f32 to vector<8x128xf32>
    %16 = arith.maximumf %14, %15 : vector<8x128xf32>
    %c0_12 = arith.constant 0 : index
    %c0_13 = arith.constant 0 : index
    %17 = vector.load %arg6[%c0_12, %c0_13] : memref<128x128xbf16, #tpu.memory_space<vmem>>, vector<128x128xbf16>
    %c0_14 = arith.constant 0 : index
    %c0_15 = arith.constant 0 : index
    %18 = vector.load %arg7[%c0_14, %c0_15] : memref<1x128xf32, #tpu.memory_space<vmem>>, vector<1x128xf32>
    %19 = arith.truncf %16 : vector<8x128xf32> to vector<8x128xbf16>
    %cst_16 = arith.constant dense<0.000000e+00> : vector<8x128xf32>
    %20 = tpu.matmul %19, %17, %cst_16 {dimension_numbers = #tpu.dot_dimension_numbers<[1], [0], [0], [1], [0, 0, 1, 1], [], []>} : vector<8x128xbf16>, vector<128x128xbf16>, vector<8x128xf32> -> vector<8x128xf32>
    %21 = vector.broadcast %18 : vector<1x128xf32> to vector<8x128xf32>
    %22 = arith.addf %20, %21 : vector<8x128xf32>
    %c0_17 = arith.constant 0 : index
    %c0_18 = arith.constant 0 : index
    %23 = vector.load %arg8[%c0_17, %c0_18] : memref<8x128xf32, #tpu.memory_space<vmem>>, vector<8x128xf32>
    tpu.vector_store %arg8[%c0_17, %c0_18], %22 {strides = array<i32>} : memref<8x128xf32, #tpu.memory_space<vmem>>, vector<8x128xf32>,
    return
  }
  func.func @transform_0(%arg0: i32) -> (i32, i32) {
    %c0_i32 = arith.constant 0 : i32
    %c0_i32_0 = arith.constant 0 : i32
    return %arg0, %c0_i32 : i32, i32
  }
  func.func @transform_1(%arg0: i32) -> (i32, i32) {
    %c0_i32 = arith.constant 0 : i32
    %c0_i32_0 = arith.constant 0 : i32
    %c0_i32_1 = arith.constant 0 : i32
    return %c0_i32, %c0_i32_0 : i32, i32
  }
  func.func @transform_2(%arg0: i32) -> (i32, i32) {
    %c0_i32 = arith.constant 0 : i32
    %c0_i32_0 = arith.constant 0 : i32
    %c0_i32_1 = arith.constant 0 : i32
    return %c0_i32, %c0_i32_0 : i32, i32
  }
  func.func @transform_3(%arg0: i32) -> (i32, i32) {
    %c0_i32 = arith.constant 0 : i32
    %c0_i32_0 = arith.constant 0 : i32
    %c0_i32_1 = arith.constant 0 : i32
    return %c0_i32, %c0_i32_0 : i32, i32
  }
  func.func @transform_4(%arg0: i32) -> (i32, i32) {
    %c0_i32 = arith.constant 0 : i32
    %c0_i32_0 = arith.constant 0 : i32
    %c0_i32_1 = arith.constant 0 : i32
    return %c0_i32, %c0_i32_0 : i32, i32
  }
  func.func @transform_5(%arg0: i32) -> (i32, i32) {
    %c0_i32 = arith.constant 0 : i32
    %c0_i32_0 = arith.constant 0 : i32
    %c0_i32_1 = arith.constant 0 : i32
    return %c0_i32, %c0_i32_0 : i32, i32
  }
  func.func @transform_6(%arg0: i32) -> (i32, i32) {
    %c0_i32 = arith.constant 0 : i32
    %c0_i32_0 = arith.constant 0 : i32
    %c0_i32_1 = arith.constant 0 : i32
    return %c0_i32, %c0_i32_0 : i32, i32
  }
  func.func @transform_7(%arg0: i32) -> (i32, i32) {
    %c0_i32 = arith.constant 0 : i32
    %c0_i32_0 = arith.constant 0 : i32
    return %arg0, %c0_i32 : i32, i32
  }
}

module attributes {stable_mosaic.version = 11 : i64} {
  func.func @_fused_mlp_kernel(%arg0: i32, %arg1: memref<8x32xf32, #tpu.memory_space<vmem>>, %arg2: memref<32x128xbf16, #tpu.memory_space<vmem>>, %arg3: memref<1x128xf32, #tpu.memory_space<vmem>>, %arg4: memref<128x128xbf16, #tpu.memory_space<vmem>>, %arg5: memref<1x128xf32, #tpu.memory_space<vmem>>, %arg6: memref<128x128xbf16, #tpu.memory_space<vmem>>, %arg7: memref<1x128xf32, #tpu.memory_space<vmem>>, %arg8: memref<8x128xf32, #tpu.memory_space<vmem>>) attributes {dimension_semantics = [#tpu.dimension_semantics<parallel>], iteration_bounds = array<i64: 2>, scalar_prefetch = 0 : i64, scratch_operands = 0 : i64, tpu.core_type = #tpu.core_type<tc>, window_params = [{transform_indices = @transform_0, window_bounds = array<i64: 8, 32>}, {pipeline_mode = #tpu.pipeline_mode<synchronous>, transform_indices = @transform_1, window_bounds = array<i64: 32, 128>}, {pipeline_mode = #tpu.pipeline_mode<synchronous>, transform_indices = @transform_2, window_bounds = array<i64: 1, 128>}, {pipeline_mode = #tpu.pipeline_mode<synchronous>, transform_indices = @transform_3, window_bounds = array<i64: 128, 128>}, {pipeline_mode = #tpu.pipeline_mode<synchronous>, transform_indices = @transform_4, window_bounds = array<i64: 1, 128>}, {pipeline_mode = #tpu.pipeline_mode<synchronous>, transform_indices = @transform_5, window_bounds = array<i64: 128, 128>}, {pipeline_mode = #tpu.pipeline_mode<synchronous>, transform_indices = @transform_6, window_bounds = array<i64: 1, 128>}, {transform_indices = @transform_7, window_bounds = array<i64: 8, 128>}]} {
    %c0 = arith.constant 0 : index
    %c0_0 = arith.constant 0 : index
    %0 = vector.load %arg1[%c0, %c0_0] : memref<8x32xf32, #tpu.memory_space<vmem>>, vector<8x32xf32>
    %c0_1 = arith.constant 0 : index
    %c0_2 = arith.constant 0 : index
    %1 = vector.load %arg2[%c0_1, %c0_2] : memref<32x128xbf16, #tpu.memory_space<vmem>>, vector<32x128xbf16>
    %c0_3 = arith.constant 0 : index
    %c0_4 = arith.constant 0 : index
    %2 = vector.load %arg3[%c0_3, %c0_4] : memref<1x128xf32, #tpu.memory_space<vmem>>, vector<1x128xf32>
    %3 = arith.truncf %0 : vector<8x32xf32> to vector<8x32xbf16>
    %cst = arith.constant dense<0.000000e+00> : vector<8x128xf32>
    %4 = tpu.matmul %3, %1, %cst {dimension_numbers = #tpu.dot_dimension_numbers<[1], [0], [0], [1], [0, 0, 1, 1], [], []>} : vector<8x32xbf16>, vector<32x128xbf16>, vector<8x128xf32> -> vector<8x128xf32>
    %5 = vector.broadcast %2 : vector<1x128xf32> to vector<8x128xf32>
    %6 = arith.addf %4, %5 : vector<8x128xf32>
    %cst_5 = arith.constant 0.000000e+00 : f32
    %7 = vector.broadcast %cst_5 : f32 to vector<8x128xf32>
    %8 = arith.maximumf %6, %7 : vector<8x128xf32>
    %c0_6 = arith.constant 0 : index
    %c0_7 = arith.constant 0 : index
    %9 = vector.load %arg4[%c0_6, %c0_7] : memref<128x128xbf16, #tpu.memory_space<vmem>>, vector<128x128xbf16>
    %c0_8 = arith.constant 0 : index
    %c0_9 = arith.constant 0 : index
    %10 = vector.load %arg5[%c0_8, %c0_9] : memref<1x128xf32, #tpu.memory_space<vmem>>, vector<1x128xf32>
    %11 = arith.truncf %8 : vector<8x128xf32> to vector<8x128xbf16>
    %cst_10 = arith.constant dense<0.000000e+00> : vector<8x128xf32>
    %12 = tpu.matmul %11, %9, %cst_10 {dimension_numbers = #tpu.dot_dimension_numbers<[1], [0], [0], [1], [0, 0, 1, 1], [], []>} : vector<8x128xbf16>, vector<128x128xbf16>, vector<8x128xf32> -> vector<8x128xf32>
    %13 = vector.broadcast %10 : vector<1x128xf32> to vector<8x128xf32>
    %14 = arith.addf %12, %13 : vector<8x128xf32>
    %cst_11 = arith.constant 0.000000e+00 : f32
    %15 = vector.broadcast %cst_11 : f32 to vector<8x128xf32>
    %16 = arith.maximumf %14, %15 : vector<8x128xf32>
    %c0_12 = arith.constant 0 : index
    %c0_13 = arith.constant 0 : index
    %17 = vector.load %arg6[%c0_12, %c0_13] : memref<128x128xbf16, #tpu.memory_space<vmem>>, vector<128x128xbf16>
    %c0_14 = arith.constant 0 : index
    %c0_15 = arith.constant 0 : index
    %18 = vector.load %arg7[%c0_14, %c0_15] : memref<1x128xf32, #tpu.memory_space<vmem>>, vector<1x128xf32>
    %19 = arith.truncf %16 : vector<8x128xf32> to vector<8x128xbf16>
    %cst_16 = arith.constant dense<0.000000e+00> : vector<8x128xf32>
    %20 = tpu.matmul %19, %17, %cst_16 {dimension_numbers = #tpu.dot_dimension_numbers<[1], [0], [0], [1], [0, 0, 1, 1], [], []>} : vector<8x128xbf16>, vector<128x128xbf16>, vector<8x128xf32> -> vector<8x128xf32>
    %21 = vector.broadcast %18 : vector<1x128xf32> to vector<8x128xf32>
    %22 = arith.addf %20, %21 : vector<8x128xf32>
    %c0_17 = arith.constant 0 : index
    %c0_18 = arith.constant 0 : index
    %23 = vector.load %arg8[%c0_17, %c0_18] : memref<8x128xf32, #tpu.memory_space<vmem>>, vector<8x128xf32>
    tpu.vector_store %arg8[%c0_17, %c0_18], %22 {strides = array<i32>} : memref<8x128xf32, #tpu.memory_space<vmem>>, vector<8x128xf32>,
    return
  }
  func.func @transform_0(%arg0: i32) -> (i32, i32) {
    %c0_i32 = arith.constant 0 : i32
    %c0_i32_0 = arith.constant 0 : i32
    return %arg0, %c0_i32 : i32, i32
  }
  func.func @transform_1(%arg0: i32) -> (i32, i32) {
    %c0_i32 = arith.constant 0 : i32
    %c0_i32_0 = arith.constant 0 : i32
    %c0_i32_1 = arith.constant 0 : i32
    return %c0_i32, %c0_i32_0 : i32, i32
  }
  func.func @transform_2(%arg0: i32) -> (i32, i32) {
    %c0_i32 = arith.constant 0 : i32
    %c0_i32_0 = arith.constant 0 : i32
    %c0_i32_1 = arith.constant 0 : i32
    return %c0_i32, %c0_i32_0 : i32, i32
  }
  func.func @transform_3(%arg0: i32) -> (i32, i32) {
    %c0_i32 = arith.constant 0 : i32
    %c0_i32_0 = arith.constant 0 : i32
    %c0_i32_1 = arith.constant 0 : i32
    return %c0_i32, %c0_i32_0 : i32, i32
  }
  func.func @transform_4(%arg0: i32) -> (i32, i32) {
    %c0_i32 = arith.constant 0 : i32
    %c0_i32_0 = arith.constant 0 : i32
    %c0_i32_1 = arith.constant 0 : i32
    return %c0_i32, %c0_i32_0 : i32, i32
  }
  func.func @transform_5(%arg0: i32) -> (i32, i32) {
    %c0_i32 = arith.constant 0 : i32
    %c0_i32_0 = arith.constant 0 : i32
    %c0_i32_1 = arith.constant 0 : i32
    return %c0_i32, %c0_i32_0 : i32, i32
  }
  func.func @transform_6(%arg0: i32) -> (i32, i32) {
    %c0_i32 = arith.constant 0 : i32
    %c0_i32_0 = arith.constant 0 : i32
    %c0_i32_1 = arith.constant 0 : i32
    return %c0_i32, %c0_i32_0 : i32, i32
  }
  func.func @transform_7(%arg0: i32) -> (i32, i32) {
    %c0_i32 = arith.constant 0 : i32
    %c0_i32_0 = arith.constant 0 : i32
    return %arg0, %c0_i32 : i32, i32
  }
}

</mosaic_0001>

<llo_original>
// kernel: tpu_custom_call.1
$region0: #{tpu_custom_call.1}
  #allocation0 [shape = 'u32[]', space=smem, size = 0x4, offset = 0x4, fixed_abs, tag = 'smem constant byte address 0x4 - core index']
  #allocation1 [shape = 'u32[144,128]{1,0:T(1,128)}', space=vmem, size = 0x12000, scoped, tag = 'internal scratch']
  %s0 = inlined_call_operand.hbm [shape: f32[16,32], index: 0, kind: input, shape index: {}]
  %s1 = inlined_call_operand.hbm [shape: bf16[32,128], index: 1, kind: input, shape index: {}]
  %s2 = inlined_call_operand.vmem [shape: f32[1,128], index: 2, kind: input, shape index: {}]
  %s3 = inlined_call_operand.hbm [shape: bf16[128,128], index: 3, kind: input, shape index: {}]
  %s4 = inlined_call_operand.vmem [shape: f32[1,128], index: 4, kind: input, shape index: {}]
  %s5 = inlined_call_operand.hbm [shape: bf16[128,128], index: 5, kind: input, shape index: {}]
  %s6 = inlined_call_operand.vmem [shape: f32[1,128], index: 6, kind: input, shape index: {}]
  %s7 = inlined_call_operand.hbm [shape: f32[16,128], index: 7, kind: output, shape index: {}]
  %s8 = sld [smem:[#allocation0]]
  $region77: #{tpu_custom_call.1} parent=0
    _
  %s10 = ssub.s32 1, %s8
  %s11 = scalar_select 0, %s10, %s8
  $region1: #{tpu_custom_call.1} parent=0
    #allocation2 [shape = 'u8[8192]{0}', space=vmem, size = 0x2000, scoped, tag = 'input window, operand 0']
    #allocation3 [shape = 's32[2]{0}', space=sflag, size = 0x8, scoped, tag = 'scoped memory for tpu_custom_call.1']
    #allocation4 [shape = 's32[2]{0}', space=sflag, size = 0x8, scoped, tag = 'scoped memory for tpu_custom_call.1']
    #allocation5 [shape = 'u8[8192]{0}', space=vmem, size = 0x2000, scoped, tag = 'input window, operand 1, single buffered']
    #allocation6 [shape = 's32[1]{0}', space=sflag, size = 0x4, scoped, tag = 'scoped memory for tpu_custom_call.1']
    #allocation7 [shape = 'u8[32768]{0}', space=vmem, size = 0x8000, scoped, tag = 'input window, operand 3, single buffered']
    #allocation8 [shape = 'u8[32768]{0}', space=vmem, size = 0x8000, scoped, tag = 'input window, operand 5, single buffered']
    #allocation9 [shape = 's32[1]{0}', space=sflag, size = 0x4, scoped, tag = 'scoped memory for tpu_custom_call.1']
    #allocation10 [shape = 'u8[8192]{0}', space=vmem, size = 0x2000, scoped, tag = 'output window, operand 0']
    %12 = vsyncpa [#allocation3], 0
    %s13 = scalar_lea.sflag [#allocation3], 1
    %14 = vsyncpa %s13, 0
    %15 = vsyncpa [#allocation6], 0
    %16 = vsyncpa [#allocation9], 0
    %17 = vsyncpa [#allocation4], 0
    %s18 = scalar_lea.sflag [#allocation4], 1
    %19 = vsyncpa %s18, 0
    loop: start=0, step=1, limit=4
    $region2: #{tpu_custom_call.1} parent=1 // loop_pre_header
      _
    $region3: #{tpu_custom_call.1} parent=1 // loop_header
      %s21 = sphi 0, %s25
      %p22 = scmp.ge.s32.totalorder %s21, 4
      %s31 = sphi 0, %s33
      %s34 = sphi 0, %s31
      %s35 = sphi 0, %s34
      %s51 = sphi 0, %s35
      %s55 = sphi 0, %s55
      %s57 = sphi 0, %s55
      %s58 = sphi 0, %s57
      %s72 = sphi 0, %s58
      %s76 = sphi 0, %s76
      %s78 = sphi 0, %s76
      %s79 = sphi 0, %s78
      %s93 = sphi 0, %s79
      %s97 = sphi 0, %s97
      %s99 = sphi 0, %s97
      %s100 = sphi 0, %s99
      %s114 = sphi 0, %s100
      %s118 = sphi 0, %s118
      %s120 = sphi 0, %s118
      %s121 = sphi 0, %s120
      %s135 = sphi 0, %s121
      %s139 = sphi 0, %s139
      %s141 = sphi 0, %s139
      %s142 = sphi 0, %s141
      %s156 = sphi 0, %s142
      %s160 = sphi 0, %s160
      %s162 = sphi 0, %s160
      %s163 = sphi 0, %s162
      %s177 = sphi 0, %s163
      %s183 = sphi 0, %s185
      %s186 = sphi 0, %s183
      %s187 = sphi 0, %s186
      %s203 = sphi 0, %s187
    $region4: #{tpu_custom_call.1} parent=1 // loop_header_branch
      %24 = sbr.rel (%p22) target = $region8
    $region5: #{tpu_custom_call.1} parent=1 // loop_body
      %s26 = ssub.s32 %s21, 1
      %s27 = ssub.s32 %s21, 2
      %s28 = sadd.s32 %s21, 1
      %s29 = ssub.s32 %s21, %s28
      %p30 = scmp.eq.s32.totalorder %s29, 0
      %s32 = sadd.s32 %s31, 1
      %s33 = scalar_select %p30, %s31, %s32
      %p36 = pneg %p30
      %p37 = scmp.eq.s32.totalorder %s21, 1
      %p38 = por %p36, %p37
      %p39 = scmp.ne.s32.totalorder %s31, %s34
      %p40 = scmp.eq.s32.totalorder %s21, 0
      %p41 = por %p39, %p40
      %p42 = scmp.ne.s32.totalorder %s31, %s34
      %p43 = scmp.eq.s32.totalorder %s26, 1
      %p44 = por %p42, %p43
      %p45 = scmp.ne.s32.totalorder %s34, %s35
      %p46 = scmp.eq.s32.totalorder %s26, 0
      %p47 = por %p45, %p46
      %p48 = scmp.ne.s32.totalorder %s34, %s35
      %p49 = scmp.eq.s32.totalorder %s27, 1
      %p50 = por %p48, %p49
      %p52 = scmp.ne.s32.totalorder %s35, %s51
      %p53 = scmp.eq.s32.totalorder %s27, 0
      %p54 = por %p52, %p53
      %s56 = sadd.s32 %s55, 1
      %p59 = scmp.eq.s32.totalorder %s21, 1
      %p60 = scmp.ne.s32.totalorder %s55, %s57
      %p61 = scmp.eq.s32.totalorder %s21, 0
      %p62 = por %p60, %p61
      %p63 = scmp.ne.s32.totalorder %s55, %s57
      %p64 = scmp.eq.s32.totalorder %s26, 1
      %p65 = por %p63, %p64
      %p66 = scmp.ne.s32.totalorder %s57, %s58
      %p67 = scmp.eq.s32.totalorder %s26, 0
      %p68 = por %p66, %p67
      %p69 = scmp.ne.s32.totalorder %s57, %s58
      %p70 = scmp.eq.s32.totalorder %s27, 1
      %p71 = por %p69, %p70
      %p73 = scmp.ne.s32.totalorder %s58, %s72
      %p74 = scmp.eq.s32.totalorder %s27, 0
      %p75 = por %p73, %p74
      %s77 = sadd.s32 %s76, 1
      %p80 = scmp.eq.s32.totalorder %s21, 1
      %p81 = scmp.ne.s32.totalorder %s76, %s78
      %p82 = scmp.eq.s32.totalorder %s21, 0
      %p83 = por %p81, %p82
      %p84 = scmp.ne.s32.totalorder %s76, %s78
      %p85 = scmp.eq.s32.totalorder %s26, 1
      %p86 = por %p84, %p85
      %p87 = scmp.ne.s32.totalorder %s78, %s79
      %p88 = scmp.eq.s32.totalorder %s26, 0
      %p89 = por %p87, %p88
      %p90 = scmp.ne.s32.totalorder %s78, %s79
      %p91 = scmp.eq.s32.totalorder %s27, 1
      %p92 = por %p90, %p91
      %p94 = scmp.ne.s32.totalorder %s79, %s93
      %p95 = scmp.eq.s32.totalorder %s27, 0
      %p96 = por %p94, %p95
      %s98 = sadd.s32 %s97, 1
      %p101 = scmp.eq.s32.totalorder %s21, 1
      %p102 = scmp.ne.s32.totalorder %s97, %s99
      %p103 = scmp.eq.s32.totalorder %s21, 0
      %p104 = por %p102, %p103
      %p105 = scmp.ne.s32.totalorder %s97, %s99
      %p106 = scmp.eq.s32.totalorder %s26, 1
      %p107 = por %p105, %p106
      %p108 = scmp.ne.s32.totalorder %s99, %s100
      %p109 = scmp.eq.s32.totalorder %s26, 0
      %p110 = por %p108, %p109
      %p111 = scmp.ne.s32.totalorder %s99, %s100
      %p112 = scmp.eq.s32.totalorder %s27, 1
      %p113 = por %p111, %p112
      %p115 = scmp.ne.s32.totalorder %s100, %s114
      %p116 = scmp.eq.s32.totalorder %s27, 0
      %p117 = por %p115, %p116
      %s119 = sadd.s32 %s118, 1
      %p122 = scmp.eq.s32.totalorder %s21, 1
      %p123 = scmp.ne.s32.totalorder %s118, %s120
      %p124 = scmp.eq.s32.totalorder %s21, 0
      %p125 = por %p123, %p124
      %p126 = scmp.ne.s32.totalorder %s118, %s120
      %p127 = scmp.eq.s32.totalorder %s26, 1
      %p128 = por %p126, %p127
      %p129 = scmp.ne.s32.totalorder %s120, %s121
      %p130 = scmp.eq.s32.totalorder %s26, 0
      %p131 = por %p129, %p130
      %p132 = scmp.ne.s32.totalorder %s120, %s121
      %p133 = scmp.eq.s32.totalorder %s27, 1
      %p134 = por %p132, %p133
      %p136 = scmp.ne.s32.totalorder %s121, %s135
      %p137 = scmp.eq.s32.totalorder %s27, 0
      %p138 = por %p136, %p137
      %s140 = sadd.s32 %s139, 1
      %p143 = scmp.eq.s32.totalorder %s21, 1
      %p144 = scmp.ne.s32.totalorder %s139, %s141
      %p145 = scmp.eq.s32.totalorder %s21, 0
      %p146 = por %p144, %p145
      %p147 = scmp.ne.s32.totalorder %s139, %s141
      %p148 = scmp.eq.s32.totalorder %s26, 1
      %p149 = por %p147, %p148
      %p150 = scmp.ne.s32.totalorder %s141, %s142
      %p151 = scmp.eq.s32.totalorder %s26, 0
      %p152 = por %p150, %p151
      %p153 = scmp.ne.s32.totalorder %s141, %s142
      %p154 = scmp.eq.s32.totalorder %s27, 1
      %p155 = por %p153, %p154
      %p157 = scmp.ne.s32.totalorder %s142, %s156
      %p158 = scmp.eq.s32.totalorder %s27, 0
      %p159 = por %p157, %p158
      %s161 = sadd.s32 %s160, 1
      %p164 = scmp.eq.s32.totalorder %s21, 1
      %p165 = scmp.ne.s32.totalorder %s160, %s162
      %p166 = scmp.eq.s32.totalorder %s21, 0
      %p167 = por %p165, %p166
      %p168 = scmp.ne.s32.totalorder %s160, %s162
      %p169 = scmp.eq.s32.totalorder %s26, 1
      %p170 = por %p168, %p169
      %p171 = scmp.ne.s32.totalorder %s162, %s163
      %p172 = scmp.eq.s32.totalorder %s26, 0
      %p173 = por %p171, %p172
      %p174 = scmp.ne.s32.totalorder %s162, %s163
      %p175 = scmp.eq.s32.totalorder %s27, 1
      %p176 = por %p174, %p175
      %p178 = scmp.ne.s32.totalorder %s163, %s177
      %p179 = scmp.eq.s32.totalorder %s27, 0
      %p180 = por %p178, %p179
      %s181 = ssub.s32 %s21, %s28
      %p182 = scmp.eq.s32.totalorder %s181, 0
      %s184 = sadd.s32 %s183, 1
      %s185 = scalar_select %p182, %s183, %s184
      %p188 = pneg %p182
      %p189 = scmp.eq.s32.totalorder %s21, 1
      %p190 = por %p188, %p189
      %p191 = scmp.ne.s32.totalorder %s183, %s186
      %p192 = scmp.eq.s32.totalorder %s21, 0
      %p193 = por %p191, %p192
      %p194 = scmp.ne.s32.totalorder %s183, %s186
      %p195 = scmp.eq.s32.totalorder %s26, 1
      %p196 = por %p194, %p195
      %p197 = scmp.ne.s32.totalorder %s186, %s187
      %p198 = scmp.eq.s32.totalorder %s26, 0
      %p199 = por %p197, %p198
      %p200 = scmp.ne.s32.totalorder %s186, %s187
      %p201 = scmp.eq.s32.totalorder %s27, 1
      %p202 = por %p200, %p201
      %p204 = scmp.ne.s32.totalorder %s187, %s203
      %p205 = scmp.eq.s32.totalorder %s27, 0
      %p206 = por %p204, %p205
      %p207 = scmp.le.s32.totalorder 1, %s21
      %p208 = scmp.lt.s32.totalorder %s21, 3
      %p209 = pnand %p207, %p208
      %p210 = pneg %p209
      // Predicated region
      $region9: #{tpu_custom_call.1} parent=5 // pred_check
        _
      $region10: #{tpu_custom_call.1} parent=5 // pred_check_branch
        %212 = sbr.rel (%p209) target = $region12
      $region11: #{tpu_custom_call.1} parent=5 // pred_region
        %s213 = ssub.s32 %s21, 1
        // Predicated region
        $region13: #{tpu_custom_call.1} parent=11 // pred_check
          %p214 = pneg %p68
        $region14: #{tpu_custom_call.1} parent=11 // pred_check_branch
          %216 = sbr.rel (%p214) target = $region16
        $region15: #{tpu_custom_call.1} parent=11 // pred_region
          %s218 = ssub.s32 256, 256
          %219 = vsyncadd [#allocation6], %s218
          %s220 = sshll.u32 [#allocation5], 4
          %s221 = int_to_ptr.vmem [resolvable:$true] %s220
          %226 = dma.hbm_to_vmem [thread:$0]  %s1, 256, %s221, [#allocation6], 64, 64, 4
        $region16: #{tpu_custom_call.1} parent=11 // pred_fallthru
          _
        // Predicated region
        $region17: #{tpu_custom_call.1} parent=11 // pred_check
          %p227 = pneg %p89
        $region18: #{tpu_custom_call.1} parent=11 // pred_check_branch
          %229 = sbr.rel (%p227) target = $region20
        $region19: #{tpu_custom_call.1} parent=11 // pred_region
          _
        $region20: #{tpu_custom_call.1} parent=11 // pred_fallthru
          _
        // Predicated region
        $region21: #{tpu_custom_call.1} parent=11 // pred_check
          %p230 = pneg %p110
        $region22: #{tpu_custom_call.1} parent=11 // pred_check_branch
          %232 = sbr.rel (%p230) target = $region24
        $region23: #{tpu_custom_call.1} parent=11 // pred_region
          %s234 = ssub.s32 1024, 1024
          %235 = vsyncadd [#allocation6], %s234
          %s236 = sshll.u32 [#allocation7], 4
          %s237 = int_to_ptr.vmem [resolvable:$true] %s236
          %242 = dma.hbm_to_vmem [thread:$0]  %s3, 1024, %s237, [#allocation6], 64, 64, 4
        $region24: #{tpu_custom_call.1} parent=11 // pred_fallthru
          _
        // Predicated region
        $region25: #{tpu_custom_call.1} parent=11 // pred_check
          %p243 = pneg %p131
        $region26: #{tpu_custom_call.1} parent=11 // pred_check_branch
          %245 = sbr.rel (%p243) target = $region28
        $region27: #{tpu_custom_call.1} parent=11 // pred_region
          _
        $region28: #{tpu_custom_call.1} parent=11 // pred_fallthru
          _
        // Predicated region
        $region29: #{tpu_custom_call.1} parent=11 // pred_check
          %p246 = pneg %p152
        $region30: #{tpu_custom_call.1} parent=11 // pred_check_branch
          %248 = sbr.rel (%p246) target = $region32
        $region31: #{tpu_custom_call.1} parent=11 // pred_region
          %s250 = ssub.s32 1024, 1024
          %251 = vsyncadd [#allocation9], %s250
          %s252 = sshll.u32 [#allocation8], 4
          %s253 = int_to_ptr.vmem [resolvable:$true] %s252
          %258 = dma.hbm_to_vmem [thread:$0]  %s5, 1024, %s253, [#allocation9], 64, 64, 4
        $region32: #{tpu_custom_call.1} parent=11 // pred_fallthru
          _
        // Predicated region
        $region33: #{tpu_custom_call.1} parent=11 // pred_check
          %p259 = pneg %p173
        $region34: #{tpu_custom_call.1} parent=11 // pred_check_branch
          %261 = sbr.rel (%p259) target = $region36
        $region35: #{tpu_custom_call.1} parent=11 // pred_region
          _
        $region36: #{tpu_custom_call.1} parent=11 // pred_fallthru
          _
      $region12: #{tpu_custom_call.1} parent=5 // pred_fallthru
        _
      %p262 = scmp.lt.s32.totalorder %s21, 2
      // Predicated region
      $region37: #{tpu_custom_call.1} parent=5 // pred_check
        %p263 = pneg %p262
      $region38: #{tpu_custom_call.1} parent=5 // pred_check_branch
        %265 = sbr.rel (%p263) target = $region40
      $region39: #{tpu_custom_call.1} parent=5 // pred_region
        // Predicated region
        $region41: #{tpu_custom_call.1} parent=39 // pred_check
          %p266 = pneg %p41
        $region42: #{tpu_custom_call.1} parent=39 // pred_check_branch
          %268 = sbr.rel (%p266) target = $region44
        $region43: #{tpu_custom_call.1} parent=39 // pred_region
          %s269 = sand.u32 %s31, 1
          %s270 = scalar_lea.sflag [#allocation3], %s269
          %s271 = sand.u32 %s31, 1
          %s272 = smul.addr %s271, 8
          %s273 = scalar_lea.vmem [#allocation2], %s272
          %s275 = ssub.s32 128, 128
          %276 = vsyncadd %s270, %s275
          %s277 = smul.addr %s21, 128
          %s278 = scalar_lea.hbm %s0, %s277
          %s280 = sshll.u32 %s273, 4
          %s281 = int_to_ptr.vmem [resolvable:$true] %s280
          %283 = dma.hbm_to_vmem [thread:$0]  %s278, 128, %s281, %s270
        $region44: #{tpu_custom_call.1} parent=39 // pred_fallthru
          _
      $region40: #{tpu_custom_call.1} parent=5 // pred_fallthru
        _
      %p284 = scmp.le.s32.totalorder 1, %s21
      %p285 = scmp.lt.s32.totalorder %s21, 3
      %p286 = pnand %p284, %p285
      %p287 = pneg %p286
      // Predicated region
      $region45: #{tpu_custom_call.1} parent=5 // pred_check
        _
      $region46: #{tpu_custom_call.1} parent=5 // pred_check_branch
        %289 = sbr.rel (%p286) target = $region48
      $region47: #{tpu_custom_call.1} parent=5 // pred_region
        %s290 = ssub.s32 %s21, 1
        %s291 = sand.u32 %s34, 1
        %s292 = scalar_lea.sflag [#allocation3], %s291
        %s293 = sand.u32 %s34, 1
        %s294 = smul.addr %s293, 8
        %s295 = scalar_lea.vmem [#allocation2], %s294
        // Predicated region
        $region49: #{tpu_custom_call.1} parent=47 // pred_check
          %p296 = pneg %p47
        $region50: #{tpu_custom_call.1} parent=47 // pred_check_branch
          %298 = sbr.rel (%p296) target = $region52
        $region51: #{tpu_custom_call.1} parent=47 // pred_region
          %299 = dma.done %s292, 128
        $region52: #{tpu_custom_call.1} parent=47 // pred_fallthru
          _
        // Predicated region
        $region53: #{tpu_custom_call.1} parent=47 // pred_check
          %p300 = pneg %p68
        $region54: #{tpu_custom_call.1} parent=47 // pred_check_branch
          %302 = sbr.rel (%p300) target = $region56
        $region55: #{tpu_custom_call.1} parent=47 // pred_region
          %303 = dma.done [#allocation6], 256
        $region56: #{tpu_custom_call.1} parent=47 // pred_fallthru
          _
        // Predicated region
        $region57: #{tpu_custom_call.1} parent=47 // pred_check
          %p304 = pneg %p110
        $region58: #{tpu_custom_call.1} parent=47 // pred_check_branch
          %306 = sbr.rel (%p304) target = $region60
        $region59: #{tpu_custom_call.1} parent=47 // pred_region
          %307 = dma.done [#allocation6], 1024
        $region60: #{tpu_custom_call.1} parent=47 // pred_fallthru
          _
        // Predicated region
        $region61: #{tpu_custom_call.1} parent=47 // pred_check
          %p308 = pneg %p152
        $region62: #{tpu_custom_call.1} parent=47 // pred_check_branch
          %310 = sbr.rel (%p308) target = $region64
        $region63: #{tpu_custom_call.1} parent=47 // pred_region
          %311 = dma.done [#allocation9], 1024
        $region64: #{tpu_custom_call.1} parent=47 // pred_fallthru
          _
        %s312 = sand.u32 %s34, 1
        %s313 = scalar_lea.sflag [#allocation3], %s312
        %s314 = sand.u32 %s34, 1
        %s315 = smul.addr %s314, 8
        %s316 = scalar_lea.vmem [#allocation2], %s315
        %p317 = pneg %p47
        %p318 = pneg %p44
        %p319 = pneg %p68
        %p320 = pneg %p65
        %p321 = pneg %p89
        %p322 = pneg %p86
        %p323 = pneg %p110
        %p324 = pneg %p107
        %p325 = pneg %p131
        %p326 = pneg %p128
        %p327 = pneg %p152
        %p328 = pneg %p149
        %p329 = pneg %p173
        %p330 = pneg %p170
        %p331 = pneg %p199
        %p332 = pneg %p196
        %s333 = sand.u32 %s186, 1
        %s334 = scalar_lea.sflag [#allocation4], %s333
        %s335 = sand.u32 %s186, 1
        %s336 = smul.addr %s335, 8
        %s337 = scalar_lea.vmem [#allocation10], %s336
        %v339 = vld [vmem:[%s295] sm:$0xff]
        %v340 = vld [vmem:[#allocation5] sm:$0xf]
        %v341 = vld [vmem:[#allocation5 + $0x4] sm:$0xf]
        %v342 = vld [vmem:[#allocation5 + $0x8] sm:$0xf]
        %v343 = vld [vmem:[#allocation5 + $0xc] sm:$0xf]
        %v344 = vld [vmem:[%s2] sm:$0x1]
        %v345 = vpack.c.bf16 %v339, %v339
        %v347 = vlaneseq
        %v348 = vshrl.u32 %v347, 7
        %v349 = vsub.s32 0, %v348
        %v350 = vrot.slane %v344, %v349
        %v356 = vunpack.c.l.b16 %v340
        %v357 = vunpack.c.l.b16 %v341
        %v358 = vunpack.c.l.b16 %v342
        %v359 = vunpack.c.l.b16 %v343
        %v360 = vpack.c.b16 %v357, %v356
        %v361 = vpack.c.b16 %v359, %v358
        %vm364 = vcmask 261120
        %v366 = vsel %vm364, %v345, 0
        %368 = vmatprep.subr.bf16.mxu0 0
        %369 = vmatpush1.bf16.msra.mxu0 0
        %370 = vmatprep.subr.bf16.mxu0 0
        %371 = vmatpush1.bf16.msra.mxu0 0
        %372 = vmatprep.subr.bf16.mxu0 0
        %373 = vmatpush1.bf16.msra.mxu0 0
        %374 = vmatprep.subr.bf16.mxu0 0
        %375 = vmatpush1.bf16.msra.mxu0 0
        %376 = vmatprep.subr.bf16.mxu0 0
        %377 = vmatpush1.bf16.msra.mxu0 0
        %378 = vmatprep.subr.bf16.mxu0 0
        %379 = vmatpush1.bf16.msra.mxu0 0
        %380 = vmatprep.subr.bf16.mxu0 0
        %381 = vmatpush1.bf16.msra.mxu0 %v361
        %382 = vmatprep.subr.bf16.mxu0 0
        %383 = vmatpush1.bf16.msra.mxu0 %v360
        %384 = vmatprep.subr.bf16.mxu0 0
        %385 = vmatpush2.bf16.msra.mxu0 0
        %386 = vmatprep.subr.bf16.mxu0 0
        %387 = vmatpush2.bf16.msra.mxu0 0
        %388 = vmatprep.subr.bf16.mxu0 0
        %389 = vmatpush2.bf16.msra.mxu0 0
        %390 = vmatprep.subr.bf16.mxu0 0
        %391 = vmatpush2.bf16.msra.mxu0 0
        %392 = vmatprep.subr.bf16.mxu0 0
        %393 = vmatpush2.bf16.msra.mxu0 0
        %394 = vmatprep.subr.bf16.mxu0 0
        %395 = vmatpush2.bf16.msra.mxu0 0
        %396 = vmatprep.subr.bf16.mxu0 0
        %397 = vmatpush2.bf16.msra.mxu0 0
        %398 = vmatprep.subr.bf16.mxu0 0
        %399 = vmatpush2.bf16.msra.mxu0 0
        %400 = vmatprep.mubr.bf16.mxu0 0
        %401 = vmatmul.mubr.bf16.gmra.mxu0 %v366
        %v402 = vpop.f32.mrf.mxu0
        %v403 = vadd.f32 %v350, %v402
        %v404 = vpop.f32.mrf.mxu0
        %v405 = vpop.f32.mrf.mxu0
        %v406 = vpop.f32.mrf.mxu0
        %407 = vdwg.mxu0
        %v408 = vmax.f32 %v403, 0.0
        %v409 = vld [vmem:[#allocation7] sm:$0xf]
        %v410 = vld [vmem:[#allocation7 + $0x4] sm:$0xf]
        %v411 = vld [vmem:[#allocation7 + $0x8] sm:$0xf]
        %v412 = vld [vmem:[#allocation7 + $0xc] sm:$0xf]
        %v413 = vld [vmem:[#allocation7 + $0x10] sm:$0xf]
        %v414 = vld [vmem:[#allocation7 + $0x14] sm:$0xf]
        %v415 = vld [vmem:[#allocation7 + $0x18] sm:$0xf]
        %v416 = vld [vmem:[#allocation7 + $0x1c] sm:$0xf]
        %v417 = vld [vmem:[#allocation7 + $0x20] sm:$0xf]
        %v418 = vld [vmem:[#allocation7 + $0x24] sm:$0xf]
        %v419 = vld [vmem:[#allocation7 + $0x28] sm:$0xf]
        %v420 = vld [vmem:[#allocation7 + $0x2c] sm:$0xf]
        %v421 = vld [vmem:[#allocation7 + $0x30] sm:$0xf]
        %v422 = vld [vmem:[#allocation7 + $0x34] sm:$0xf]
        %v423 = vld [vmem:[#allocation7 + $0x38] sm:$0xf]
        %v424 = vld [vmem:[#allocation7 + $0x3c] sm:$0xf]
        %v425 = vld [vmem:[%s4] sm:$0x1]
        %v426 = vpack.c.bf16 %v408, %v408
        %v428 = vlaneseq
        %v429 = vshrl.u32 %v428, 7
        %v430 = vsub.s32 0, %v429
        %v431 = vrot.slane %v425, %v430
        %v449 = vunpack.c.l.b16 %v409
        %v450 = vunpack.c.l.b16 %v410
        %v451 = vunpack.c.l.b16 %v411
        %v452 = vunpack.c.l.b16 %v412
        %v453 = vunpack.c.l.b16 %v413
        %v454 = vunpack.c.l.b16 %v414
        %v455 = vunpack.c.l.b16 %v415
        %v456 = vunpack.c.l.b16 %v416
        %v457 = vunpack.c.l.b16 %v417
        %v458 = vunpack.c.l.b16 %v418
        %v459 = vunpack.c.l.b16 %v419
        %v460 = vunpack.c.l.b16 %v420
        %v461 = vunpack.c.l.b16 %v421
        %v462 = vunpack.c.l.b16 %v422
        %v463 = vunpack.c.l.b16 %v423
        %v464 = vunpack.c.l.b16 %v424
        %v465 = vpack.c.b16 %v450, %v449
        %v466 = vpack.c.b16 %v452, %v451
        %v467 = vpack.c.b16 %v454, %v453
        %v468 = vpack.c.b16 %v456, %v455
        %v469 = vpack.c.b16 %v458, %v457
        %v470 = vpack.c.b16 %v460, %v459
        %v471 = vpack.c.b16 %v462, %v461
        %v472 = vpack.c.b16 %v464, %v463
        %481 = vmatprep.subr.bf16.mxu0 0
        %482 = vmatpush1.bf16.msra.mxu0 %v472
        %483 = vmatprep.subr.bf16.mxu0 0
        %484 = vmatpush1.bf16.msra.mxu0 %v471
        %485 = vmatprep.subr.bf16.mxu0 0
        %486 = vmatpush1.bf16.msra.mxu0 %v470
        %487 = vmatprep.subr.bf16.mxu0 0
        %488 = vmatpush1.bf16.msra.mxu0 %v469
        %489 = vmatprep.subr.bf16.mxu0 0
        %490 = vmatpush1.bf16.msra.mxu0 %v468
        %491 = vmatprep.subr.bf16.mxu0 0
        %492 = vmatpush1.bf16.msra.mxu0 %v467
        %493 = vmatprep.subr.bf16.mxu0 0
        %494 = vmatpush1.bf16.msra.mxu0 %v466
        %495 = vmatprep.subr.bf16.mxu0 0
        %496 = vmatpush1.bf16.msra.mxu0 %v465
        %497 = vmatprep.subr.bf16.mxu0 0
        %498 = vmatpush2.bf16.msra.mxu0 0
        %499 = vmatprep.subr.bf16.mxu0 0
        %500 = vmatpush2.bf16.msra.mxu0 0
        %501 = vmatprep.subr.bf16.mxu0 0
        %502 = vmatpush2.bf16.msra.mxu0 0
        %503 = vmatprep.subr.bf16.mxu0 0
        %504 = vmatpush2.bf16.msra.mxu0 0
        %505 = vmatprep.subr.bf16.mxu0 0
        %506 = vmatpush2.bf16.msra.mxu0 0
        %507 = vmatprep.subr.bf16.mxu0 0
        %508 = vmatpush2.bf16.msra.mxu0 0
        %509 = vmatprep.subr.bf16.mxu0 0
        %510 = vmatpush2.bf16.msra.mxu0 0
        %511 = vmatprep.subr.bf16.mxu0 0
        %512 = vmatpush2.bf16.msra.mxu0 0
        %513 = vmatprep.mubr.bf16.mxu0 0
        %514 = vmatmul.mubr.bf16.gmra.mxu0 %v426
        %v515 = vpop.f32.mrf.mxu0
        %v516 = vadd.f32 %v431, %v515
        %v517 = vpop.f32.mrf.mxu0
        %v518 = vpop.f32.mrf.mxu0
        %v519 = vpop.f32.mrf.mxu0
        %520 = vdwg.mxu0
        %v521 = vmax.f32 %v516, 0.0
        %v522 = vld [vmem:[#allocation8] sm:$0xf]
        %v523 = vld [vmem:[#allocation8 + $0x4] sm:$0xf]
        %v524 = vld [vmem:[#allocation8 + $0x8] sm:$0xf]
        %v525 = vld [vmem:[#allocation8 + $0xc] sm:$0xf]
        %v526 = vld [vmem:[#allocation8 + $0x10] sm:$0xf]
        %v527 = vld [vmem:[#allocation8 + $0x14] sm:$0xf]
        %v528 = vld [vmem:[#allocation8 + $0x18] sm:$0xf]
        %v529 = vld [vmem:[#allocation8 + $0x1c] sm:$0xf]
        %v530 = vld [vmem:[#allocation8 + $0x20] sm:$0xf]
        %v531 = vld [vmem:[#allocation8 + $0x24] sm:$0xf]
        %v532 = vld [vmem:[#allocation8 + $0x28] sm:$0xf]
        %v533 = vld [vmem:[#allocation8 + $0x2c] sm:$0xf]
        %v534 = vld [vmem:[#allocation8 + $0x30] sm:$0xf]
        %v535 = vld [vmem:[#allocation8 + $0x34] sm:$0xf]
        %v536 = vld [vmem:[#allocation8 + $0x38] sm:$0xf]
        %v537 = vld [vmem:[#allocation8 + $0x3c] sm:$0xf]
        %v538 = vld [vmem:[%s6] sm:$0x1]
        %v539 = vpack.c.bf16 %v521, %v521
        %v541 = vlaneseq
        %v542 = vshrl.u32 %v541, 7
        %v543 = vsub.s32 0, %v542
        %v544 = vrot.slane %v538, %v543
        %v562 = vunpack.c.l.b16 %v522
        %v563 = vunpack.c.l.b16 %v523
        %v564 = vunpack.c.l.b16 %v524
        %v565 = vunpack.c.l.b16 %v525
        %v566 = vunpack.c.l.b16 %v526
        %v567 = vunpack.c.l.b16 %v527
        %v568 = vunpack.c.l.b16 %v528
        %v569 = vunpack.c.l.b16 %v529
        %v570 = vunpack.c.l.b16 %v530
        %v571 = vunpack.c.l.b16 %v531
        %v572 = vunpack.c.l.b16 %v532
        %v573 = vunpack.c.l.b16 %v533
        %v574 = vunpack.c.l.b16 %v534
        %v575 = vunpack.c.l.b16 %v535
        %v576 = vunpack.c.l.b16 %v536
        %v577 = vunpack.c.l.b16 %v537
        %v578 = vpack.c.b16 %v563, %v562
        %v579 = vpack.c.b16 %v565, %v564
        %v580 = vpack.c.b16 %v567, %v566
        %v581 = vpack.c.b16 %v569, %v568
        %v582 = vpack.c.b16 %v571, %v570
        %v583 = vpack.c.b16 %v573, %v572
        %v584 = vpack.c.b16 %v575, %v574
        %v585 = vpack.c.b16 %v577, %v576
        %594 = vmatprep.subr.bf16.mxu0 0
        %595 = vmatpush1.bf16.msra.mxu0 %v585
        %596 = vmatprep.subr.bf16.mxu0 0
        %597 = vmatpush1.bf16.msra.mxu0 %v584
        %598 = vmatprep.subr.bf16.mxu0 0
        %599 = vmatpush1.bf16.msra.mxu0 %v583
        %600 = vmatprep.subr.bf16.mxu0 0
        %601 = vmatpush1.bf16.msra.mxu0 %v582
        %602 = vmatprep.subr.bf16.mxu0 0
        %603 = vmatpush1.bf16.msra.mxu0 %v581
        %604 = vmatprep.subr.bf16.mxu0 0
        %605 = vmatpush1.bf16.msra.mxu0 %v580
        %606 = vmatprep.subr.bf16.mxu0 0
        %607 = vmatpush1.bf16.msra.mxu0 %v579
        %608 = vmatprep.subr.bf16.mxu0 0
        %609 = vmatpush1.bf16.msra.mxu0 %v578
        %610 = vmatprep.subr.bf16.mxu0 0
        %611 = vmatpush2.bf16.msra.mxu0 0
        %612 = vmatprep.subr.bf16.mxu0 0
        %613 = vmatpush2.bf16.msra.mxu0 0
        %614 = vmatprep.subr.bf16.mxu0 0
        %615 = vmatpush2.bf16.msra.mxu0 0
        %616 = vmatprep.subr.bf16.mxu0 0
        %617 = vmatpush2.bf16.msra.mxu0 0
        %618 = vmatprep.subr.bf16.mxu0 0
        %619 = vmatpush2.bf16.msra.mxu0 0
        %620 = vmatprep.subr.bf16.mxu0 0
        %621 = vmatpush2.bf16.msra.mxu0 0
        %622 = vmatprep.subr.bf16.mxu0 0
        %623 = vmatpush2.bf16.msra.mxu0 0
        %624 = vmatprep.subr.bf16.mxu0 0
        %625 = vmatpush2.bf16.msra.mxu0 0
        %626 = vmatprep.mubr.bf16.mxu0 0
        %627 = vmatmul.mubr.bf16.gmra.mxu0 %v539
        %v628 = vpop.f32.mrf.mxu0
        %v629 = vadd.f32 %v544, %v628
        %v630 = vpop.f32.mrf.mxu0
        %v631 = vpop.f32.mrf.mxu0
        %v632 = vpop.f32.mrf.mxu0
        %633 = vdwg.mxu0
        %634 = vst [vmem:[%s337] sm:$0xff] %v629
        %s635 = sand.u32 %s186, 1
        %s636 = scalar_lea.sflag [#allocation4], %s635
        %s637 = sand.u32 %s186, 1
        %s638 = smul.addr %s637, 8
        %s639 = scalar_lea.vmem [#allocation10], %s638
        // Predicated region
        $region65: #{tpu_custom_call.1} parent=47 // pred_check
          %p640 = pneg %p196
        $region66: #{tpu_custom_call.1} parent=47 // pred_check_branch
          %642 = sbr.rel (%p640) target = $region68
        $region67: #{tpu_custom_call.1} parent=47 // pred_region
          %s644 = ssub.s32 128, 128
          %645 = vsyncadd %s636, %s644
          %s646 = smul.addr %s26, 128
          %s647 = scalar_lea.hbm %s7, %s646
          %s649 = sshll.u32 %s639, 4
          %s650 = int_to_ptr.vmem [resolvable:$true] %s649
          %652 = dma.vmem_to_hbm [thread:$0]  %s650, 128, %s647, %s636
        $region68: #{tpu_custom_call.1} parent=47 // pred_fallthru
          _
      $region48: #{tpu_custom_call.1} parent=5 // pred_fallthru
        _
      %p653 = scmp.le.s32.totalorder 2, %s21
      // Predicated region
      $region69: #{tpu_custom_call.1} parent=5 // pred_check
        %p654 = pneg %p653
      $region70: #{tpu_custom_call.1} parent=5 // pred_check_branch
        %656 = sbr.rel (%p654) target = $region72
      $region71: #{tpu_custom_call.1} parent=5 // pred_region
        %s657 = ssub.s32 %s21, 2
        // Predicated region
        $region73: #{tpu_custom_call.1} parent=71 // pred_check
          %p658 = pneg %p202
        $region74: #{tpu_custom_call.1} parent=71 // pred_check_branch
          %660 = sbr.rel (%p658) target = $region76
        $region75: #{tpu_custom_call.1} parent=71 // pred_region
          %s661 = sand.u32 %s187, 1
          %s662 = scalar_lea.sflag [#allocation4], %s661
          %s663 = sand.u32 %s187, 1
          %s664 = smul.addr %s663, 8
          %s665 = scalar_lea.vmem [#allocation10], %s664
          %666 = dma.done %s662, 128
        $region76: #{tpu_custom_call.1} parent=71 // pred_fallthru
          _
      $region72: #{tpu_custom_call.1} parent=5 // pred_fallthru
        _
    $region6: #{tpu_custom_call.1} parent=1 // loop_footer
      %s25 = sadd.s32 1, %s21
    $region7: #{tpu_custom_call.1} parent=1 // loop_footer_branch
      %20 = sbr.rel target = $region3
    $region8: #{tpu_custom_call.1} parent=1 // loop_exit
      _
    %667 = vsyncpa [#allocation3], 1
    %s668 = scalar_lea.sflag [#allocation3], 1
    %669 = vsyncpa %s668, 1
    %670 = vsyncpa [#allocation6], 1
    %671 = vsyncpa [#allocation9], 1
    %672 = vsyncpa [#allocation4], 1
    %s673 = scalar_lea.sflag [#allocation4], 1
    %674 = vsyncpa %s673, 1

// kernel: tpu_custom_call.1
$region0: #{tpu_custom_call.1}
  #allocation0 [shape = 'u32[]', space=smem, size = 0x4, offset = 0x4, fixed_abs, tag = 'smem constant byte address 0x4 - core index']
  #allocation1 [shape = 'u32[144,128]{1,0:T(1,128)}', space=vmem, size = 0x12000, scoped, tag = 'internal scratch']
  %s0 = inlined_call_operand.hbm [shape: f32[16,32], index: 0, kind: input, shape index: {}]
  %s1 = inlined_call_operand.hbm [shape: bf16[32,128], index: 1, kind: input, shape index: {}]
  %s2 = inlined_call_operand.vmem [shape: f32[1,128], index: 2, kind: input, shape index: {}]
  %s3 = inlined_call_operand.hbm [shape: bf16[128,128], index: 3, kind: input, shape index: {}]
  %s4 = inlined_call_operand.vmem [shape: f32[1,128], index: 4, kind: input, shape index: {}]
  %s5 = inlined_call_operand.hbm [shape: bf16[128,128], index: 5, kind: input, shape index: {}]
  %s6 = inlined_call_operand.vmem [shape: f32[1,128], index: 6, kind: input, shape index: {}]
  %s7 = inlined_call_operand.hbm [shape: f32[16,128], index: 7, kind: output, shape index: {}]
  %s8 = sld [smem:[#allocation0]]
  $region77: #{tpu_custom_call.1} parent=0
    _
  %s10 = ssub.s32 1, %s8
  %s11 = scalar_select 0, %s10, %s8
  $region1: #{tpu_custom_call.1} parent=0
    #allocation2 [shape = 'u8[8192]{0}', space=vmem, size = 0x2000, scoped, tag = 'input window, operand 0']
    #allocation3 [shape = 's32[2]{0}', space=sflag, size = 0x8, scoped, tag = 'scoped memory for tpu_custom_call.1']
    #allocation4 [shape = 's32[2]{0}', space=sflag, size = 0x8, scoped, tag = 'scoped memory for tpu_custom_call.1']
    #allocation5 [shape = 'u8[8192]{0}', space=vmem, size = 0x2000, scoped, tag = 'input window, operand 1, single buffered']
    #allocation6 [shape = 's32[1]{0}', space=sflag, size = 0x4, scoped, tag = 'scoped memory for tpu_custom_call.1']
    #allocation7 [shape = 'u8[32768]{0}', space=vmem, size = 0x8000, scoped, tag = 'input window, operand 3, single buffered']
    #allocation8 [shape = 'u8[32768]{0}', space=vmem, size = 0x8000, scoped, tag = 'input window, operand 5, single buffered']
    #allocation9 [shape = 's32[1]{0}', space=sflag, size = 0x4, scoped, tag = 'scoped memory for tpu_custom_call.1']
    #allocation10 [shape = 'u8[8192]{0}', space=vmem, size = 0x2000, scoped, tag = 'output window, operand 0']
    %12 = vsyncpa [#allocation3], 0
    %s13 = scalar_lea.sflag [#allocation3], 1
    %14 = vsyncpa %s13, 0
    %15 = vsyncpa [#allocation6], 0
    %16 = vsyncpa [#allocation9], 0
    %17 = vsyncpa [#allocation4], 0
    %s18 = scalar_lea.sflag [#allocation4], 1
    %19 = vsyncpa %s18, 0
    loop: start=0, step=1, limit=4
    $region2: #{tpu_custom_call.1} parent=1 // loop_pre_header
      _
    $region3: #{tpu_custom_call.1} parent=1 // loop_header
      %s21 = sphi 0, %s25
      %p22 = scmp.ge.s32.totalorder %s21, 4
      %s31 = sphi 0, %s33
      %s34 = sphi 0, %s31
      %s35 = sphi 0, %s34
      %s51 = sphi 0, %s35
      %s55 = sphi 0, %s55
      %s57 = sphi 0, %s55
      %s58 = sphi 0, %s57
      %s72 = sphi 0, %s58
      %s76 = sphi 0, %s76
      %s78 = sphi 0, %s76
      %s79 = sphi 0, %s78
      %s93 = sphi 0, %s79
      %s97 = sphi 0, %s97
      %s99 = sphi 0, %s97
      %s100 = sphi 0, %s99
      %s114 = sphi 0, %s100
      %s118 = sphi 0, %s118
      %s120 = sphi 0, %s118
      %s121 = sphi 0, %s120
      %s135 = sphi 0, %s121
      %s139 = sphi 0, %s139
      %s141 = sphi 0, %s139
      %s142 = sphi 0, %s141
      %s156 = sphi 0, %s142
      %s160 = sphi 0, %s160
      %s162 = sphi 0, %s160
      %s163 = sphi 0, %s162
      %s177 = sphi 0, %s163
      %s183 = sphi 0, %s185
      %s186 = sphi 0, %s183
      %s187 = sphi 0, %s186
      %s203 = sphi 0, %s187
    $region4: #{tpu_custom_call.1} parent=1 // loop_header_branch
      %24 = sbr.rel (%p22) target = $region8
    $region5: #{tpu_custom_call.1} parent=1 // loop_body
      %s26 = ssub.s32 %s21, 1
      %s27 = ssub.s32 %s21, 2
      %s28 = sadd.s32 %s21, 1
      %s29 = ssub.s32 %s21, %s28
      %p30 = scmp.eq.s32.totalorder %s29, 0
      %s32 = sadd.s32 %s31, 1
      %s33 = scalar_select %p30, %s31, %s32
      %p36 = pneg %p30
      %p37 = scmp.eq.s32.totalorder %s21, 1
      %p38 = por %p36, %p37
      %p39 = scmp.ne.s32.totalorder %s31, %s34
      %p40 = scmp.eq.s32.totalorder %s21, 0
      %p41 = por %p39, %p40
      %p42 = scmp.ne.s32.totalorder %s31, %s34
      %p43 = scmp.eq.s32.totalorder %s26, 1
      %p44 = por %p42, %p43
      %p45 = scmp.ne.s32.totalorder %s34, %s35
      %p46 = scmp.eq.s32.totalorder %s26, 0
      %p47 = por %p45, %p46
      %p48 = scmp.ne.s32.totalorder %s34, %s35
      %p49 = scmp.eq.s32.totalorder %s27, 1
      %p50 = por %p48, %p49
      %p52 = scmp.ne.s32.totalorder %s35, %s51
      %p53 = scmp.eq.s32.totalorder %s27, 0
      %p54 = por %p52, %p53
      %s56 = sadd.s32 %s55, 1
      %p59 = scmp.eq.s32.totalorder %s21, 1
      %p60 = scmp.ne.s32.totalorder %s55, %s57
      %p61 = scmp.eq.s32.totalorder %s21, 0
      %p62 = por %p60, %p61
      %p63 = scmp.ne.s32.totalorder %s55, %s57
      %p64 = scmp.eq.s32.totalorder %s26, 1
      %p65 = por %p63, %p64
      %p66 = scmp.ne.s32.totalorder %s57, %s58
      %p67 = scmp.eq.s32.totalorder %s26, 0
      %p68 = por %p66, %p67
      %p69 = scmp.ne.s32.totalorder %s57, %s58
      %p70 = scmp.eq.s32.totalorder %s27, 1
      %p71 = por %p69, %p70
      %p73 = scmp.ne.s32.totalorder %s58, %s72
      %p74 = scmp.eq.s32.totalorder %s27, 0
      %p75 = por %p73, %p74
      %s77 = sadd.s32 %s76, 1
      %p80 = scmp.eq.s32.totalorder %s21, 1
      %p81 = scmp.ne.s32.totalorder %s76, %s78
      %p82 = scmp.eq.s32.totalorder %s21, 0
      %p83 = por %p81, %p82
      %p84 = scmp.ne.s32.totalorder %s76, %s78
      %p85 = scmp.eq.s32.totalorder %s26, 1
      %p86 = por %p84, %p85
      %p87 = scmp.ne.s32.totalorder %s78, %s79
      %p88 = scmp.eq.s32.totalorder %s26, 0
      %p89 = por %p87, %p88
      %p90 = scmp.ne.s32.totalorder %s78, %s79
      %p91 = scmp.eq.s32.totalorder %s27, 1
      %p92 = por %p90, %p91
      %p94 = scmp.ne.s32.totalorder %s79, %s93
      %p95 = scmp.eq.s32.totalorder %s27, 0
      %p96 = por %p94, %p95
      %s98 = sadd.s32 %s97, 1
      %p101 = scmp.eq.s32.totalorder %s21, 1
      %p102 = scmp.ne.s32.totalorder %s97, %s99
      %p103 = scmp.eq.s32.totalorder %s21, 0
      %p104 = por %p102, %p103
      %p105 = scmp.ne.s32.totalorder %s97, %s99
      %p106 = scmp.eq.s32.totalorder %s26, 1
      %p107 = por %p105, %p106
      %p108 = scmp.ne.s32.totalorder %s99, %s100
      %p109 = scmp.eq.s32.totalorder %s26, 0
      %p110 = por %p108, %p109
      %p111 = scmp.ne.s32.totalorder %s99, %s100
      %p112 = scmp.eq.s32.totalorder %s27, 1
      %p113 = por %p111, %p112
      %p115 = scmp.ne.s32.totalorder %s100, %s114
      %p116 = scmp.eq.s32.totalorder %s27, 0
      %p117 = por %p115, %p116
      %s119 = sadd.s32 %s118, 1
      %p122 = scmp.eq.s32.totalorder %s21, 1
      %p123 = scmp.ne.s32.totalorder %s118, %s120
      %p124 = scmp.eq.s32.totalorder %s21, 0
      %p125 = por %p123, %p124
      %p126 = scmp.ne.s32.totalorder %s118, %s120
      %p127 = scmp.eq.s32.totalorder %s26, 1
      %p128 = por %p126, %p127
      %p129 = scmp.ne.s32.totalorder %s120, %s121
      %p130 = scmp.eq.s32.totalorder %s26, 0
      %p131 = por %p129, %p130
      %p132 = scmp.ne.s32.totalorder %s120, %s121
      %p133 = scmp.eq.s32.totalorder %s27, 1
      %p134 = por %p132, %p133
      %p136 = scmp.ne.s32.totalorder %s121, %s135
      %p137 = scmp.eq.s32.totalorder %s27, 0
      %p138 = por %p136, %p137
      %s140 = sadd.s32 %s139, 1
      %p143 = scmp.eq.s32.totalorder %s21, 1
      %p144 = scmp.ne.s32.totalorder %s139, %s141
      %p145 = scmp.eq.s32.totalorder %s21, 0
      %p146 = por %p144, %p145
      %p147 = scmp.ne.s32.totalorder %s139, %s141
      %p148 = scmp.eq.s32.totalorder %s26, 1
      %p149 = por %p147, %p148
      %p150 = scmp.ne.s32.totalorder %s141, %s142
      %p151 = scmp.eq.s32.totalorder %s26, 0
      %p152 = por %p150, %p151
      %p153 = scmp.ne.s32.totalorder %s141, %s142
      %p154 = scmp.eq.s32.totalorder %s27, 1
      %p155 = por %p153, %p154
      %p157 = scmp.ne.s32.totalorder %s142, %s156
      %p158 = scmp.eq.s32.totalorder %s27, 0
      %p159 = por %p157, %p158
      %s161 = sadd.s32 %s160, 1
      %p164 = scmp.eq.s32.totalorder %s21, 1
      %p165 = scmp.ne.s32.totalorder %s160, %s162
      %p166 = scmp.eq.s32.totalorder %s21, 0
      %p167 = por %p165, %p166
      %p168 = scmp.ne.s32.totalorder %s160, %s162
      %p169 = scmp.eq.s32.totalorder %s26, 1
      %p170 = por %p168, %p169
      %p171 = scmp.ne.s32.totalorder %s162, %s163
      %p172 = scmp.eq.s32.totalorder %s26, 0
      %p173 = por %p171, %p172
      %p174 = scmp.ne.s32.totalorder %s162, %s163
      %p175 = scmp.eq.s32.totalorder %s27, 1
      %p176 = por %p174, %p175
      %p178 = scmp.ne.s32.totalorder %s163, %s177
      %p179 = scmp.eq.s32.totalorder %s27, 0
      %p180 = por %p178, %p179
      %s181 = ssub.s32 %s21, %s28
      %p182 = scmp.eq.s32.totalorder %s181, 0
      %s184 = sadd.s32 %s183, 1
      %s185 = scalar_select %p182, %s183, %s184
      %p188 = pneg %p182
      %p189 = scmp.eq.s32.totalorder %s21, 1
      %p190 = por %p188, %p189
      %p191 = scmp.ne.s32.totalorder %s183, %s186
      %p192 = scmp.eq.s32.totalorder %s21, 0
      %p193 = por %p191, %p192
      %p194 = scmp.ne.s32.totalorder %s183, %s186
      %p195 = scmp.eq.s32.totalorder %s26, 1
      %p196 = por %p194, %p195
      %p197 = scmp.ne.s32.totalorder %s186, %s187
      %p198 = scmp.eq.s32.totalorder %s26, 0
      %p199 = por %p197, %p198
      %p200 = scmp.ne.s32.totalorder %s186, %s187
      %p201 = scmp.eq.s32.totalorder %s27, 1
      %p202 = por %p200, %p201
      %p204 = scmp.ne.s32.totalorder %s187, %s203
      %p205 = scmp.eq.s32.totalorder %s27, 0
      %p206 = por %p204, %p205
      %p207 = scmp.le.s32.totalorder 1, %s21
      %p208 = scmp.lt.s32.totalorder %s21, 3
      %p209 = pnand %p207, %p208
      %p210 = pneg %p209
      // Predicated region
      $region9: #{tpu_custom_call.1} parent=5 // pred_check
        _
      $region10: #{tpu_custom_call.1} parent=5 // pred_check_branch
        %212 = sbr.rel (%p209) target = $region12
      $region11: #{tpu_custom_call.1} parent=5 // pred_region
        %s213 = ssub.s32 %s21, 1
        // Predicated region
        $region13: #{tpu_custom_call.1} parent=11 // pred_check
          %p214 = pneg %p68
        $region14: #{tpu_custom_call.1} parent=11 // pred_check_branch
          %216 = sbr.rel (%p214) target = $region16
        $region15: #{tpu_custom_call.1} parent=11 // pred_region
          %s218 = ssub.s32 256, 256
          %219 = vsyncadd [#allocation6], %s218
          %s220 = sshll.u32 [#allocation5], 4
          %s221 = int_to_ptr.vmem [resolvable:$true] %s220
          %226 = dma.hbm_to_vmem [thread:$0]  %s1, 256, %s221, [#allocation6], 64, 64, 4
        $region16: #{tpu_custom_call.1} parent=11 // pred_fallthru
          _
        // Predicated region
        $region17: #{tpu_custom_call.1} parent=11 // pred_check
          %p227 = pneg %p89
        $region18: #{tpu_custom_call.1} parent=11 // pred_check_branch
          %229 = sbr.rel (%p227) target = $region20
        $region19: #{tpu_custom_call.1} parent=11 // pred_region
          _
        $region20: #{tpu_custom_call.1} parent=11 // pred_fallthru
          _
        // Predicated region
        $region21: #{tpu_custom_call.1} parent=11 // pred_check
          %p230 = pneg %p110
        $region22: #{tpu_custom_call.1} parent=11 // pred_check_branch
          %232 = sbr.rel (%p230) target = $region24
        $region23: #{tpu_custom_call.1} parent=11 // pred_region
          %s234 = ssub.s32 1024, 1024
          %235 = vsyncadd [#allocation6], %s234
          %s236 = sshll.u32 [#allocation7], 4
          %s237 = int_to_ptr.vmem [resolvable:$true] %s236
          %242 = dma.hbm_to_vmem [thread:$0]  %s3, 1024, %s237, [#allocation6], 64, 64, 4
        $region24: #{tpu_custom_call.1} parent=11 // pred_fallthru
          _
        // Predicated region
        $region25: #{tpu_custom_call.1} parent=11 // pred_check
          %p243 = pneg %p131
        $region26: #{tpu_custom_call.1} parent=11 // pred_check_branch
          %245 = sbr.rel (%p243) target = $region28
        $region27: #{tpu_custom_call.1} parent=11 // pred_region
          _
        $region28: #{tpu_custom_call.1} parent=11 // pred_fallthru
          _
        // Predicated region
        $region29: #{tpu_custom_call.1} parent=11 // pred_check
          %p246 = pneg %p152
        $region30: #{tpu_custom_call.1} parent=11 // pred_check_branch
          %248 = sbr.rel (%p246) target = $region32
        $region31: #{tpu_custom_call.1} parent=11 // pred_region
          %s250 = ssub.s32 1024, 1024
          %251 = vsyncadd [#allocation9], %s250
          %s252 = sshll.u32 [#allocation8], 4
          %s253 = int_to_ptr.vmem [resolvable:$true] %s252
          %258 = dma.hbm_to_vmem [thread:$0]  %s5, 1024, %s253, [#allocation9], 64, 64, 4
        $region32: #{tpu_custom_call.1} parent=11 // pred_fallthru
          _
        // Predicated region
        $region33: #{tpu_custom_call.1} parent=11 // pred_check
          %p259 = pneg %p173
        $region34: #{tpu_custom_call.1} parent=11 // pred_check_branch
          %261 = sbr.rel (%p259) target = $region36
        $region35: #{tpu_custom_call.1} parent=11 // pred_region
          _
        $region36: #{tpu_custom_call.1} parent=11 // pred_fallthru
          _
      $region12: #{tpu_custom_call.1} parent=5 // pred_fallthru
        _
      %p262 = scmp.lt.s32.totalorder %s21, 2
      // Predicated region
      $region37: #{tpu_custom_call.1} parent=5 // pred_check
        %p263 = pneg %p262
      $region38: #{tpu_custom_call.1} parent=5 // pred_check_branch
        %265 = sbr.rel (%p263) target = $region40
      $region39: #{tpu_custom_call.1} parent=5 // pred_region
        // Predicated region
        $region41: #{tpu_custom_call.1} parent=39 // pred_check
          %p266 = pneg %p41
        $region42: #{tpu_custom_call.1} parent=39 // pred_check_branch
          %268 = sbr.rel (%p266) target = $region44
        $region43: #{tpu_custom_call.1} parent=39 // pred_region
          %s269 = sand.u32 %s31, 1
          %s270 = scalar_lea.sflag [#allocation3], %s269
          %s271 = sand.u32 %s31, 1
          %s272 = smul.addr %s271, 8
          %s273 = scalar_lea.vmem [#allocation2], %s272
          %s275 = ssub.s32 128, 128
          %276 = vsyncadd %s270, %s275
          %s277 = smul.addr %s21, 128
          %s278 = scalar_lea.hbm %s0, %s277
          %s280 = sshll.u32 %s273, 4
          %s281 = int_to_ptr.vmem [resolvable:$true] %s280
          %283 = dma.hbm_to_vmem [thread:$0]  %s278, 128, %s281, %s270
        $region44: #{tpu_custom_call.1} parent=39 // pred_fallthru
          _
      $region40: #{tpu_custom_call.1} parent=5 // pred_fallthru
        _
      %p284 = scmp.le.s32.totalorder 1, %s21
      %p285 = scmp.lt.s32.totalorder %s21, 3
      %p286 = pnand %p284, %p285
      %p287 = pneg %p286
      // Predicated region
      $region45: #{tpu_custom_call.1} parent=5 // pred_check
        _
      $region46: #{tpu_custom_call.1} parent=5 // pred_check_branch
        %289 = sbr.rel (%p286) target = $region48
      $region47: #{tpu_custom_call.1} parent=5 // pred_region
        %s290 = ssub.s32 %s21, 1
        %s291 = sand.u32 %s34, 1
        %s292 = scalar_lea.sflag [#allocation3], %s291
        %s293 = sand.u32 %s34, 1
        %s294 = smul.addr %s293, 8
        %s295 = scalar_lea.vmem [#allocation2], %s294
        // Predicated region
        $region49: #{tpu_custom_call.1} parent=47 // pred_check
          %p296 = pneg %p47
        $region50: #{tpu_custom_call.1} parent=47 // pred_check_branch
          %298 = sbr.rel (%p296) target = $region52
        $region51: #{tpu_custom_call.1} parent=47 // pred_region
          %299 = dma.done %s292, 128
        $region52: #{tpu_custom_call.1} parent=47 // pred_fallthru
          _
        // Predicated region
        $region53: #{tpu_custom_call.1} parent=47 // pred_check
          %p300 = pneg %p68
        $region54: #{tpu_custom_call.1} parent=47 // pred_check_branch
          %302 = sbr.rel (%p300) target = $region56
        $region55: #{tpu_custom_call.1} parent=47 // pred_region
          %303 = dma.done [#allocation6], 256
        $region56: #{tpu_custom_call.1} parent=47 // pred_fallthru
          _
        // Predicated region
        $region57: #{tpu_custom_call.1} parent=47 // pred_check
          %p304 = pneg %p110
        $region58: #{tpu_custom_call.1} parent=47 // pred_check_branch
          %306 = sbr.rel (%p304) target = $region60
        $region59: #{tpu_custom_call.1} parent=47 // pred_region
          %307 = dma.done [#allocation6], 1024
        $region60: #{tpu_custom_call.1} parent=47 // pred_fallthru
          _
        // Predicated region
        $region61: #{tpu_custom_call.1} parent=47 // pred_check
          %p308 = pneg %p152
        $region62: #{tpu_custom_call.1} parent=47 // pred_check_branch
          %310 = sbr.rel (%p308) target = $region64
        $region63: #{tpu_custom_call.1} parent=47 // pred_region
          %311 = dma.done [#allocation9], 1024
        $region64: #{tpu_custom_call.1} parent=47 // pred_fallthru
          _
        %s312 = sand.u32 %s34, 1
        %s313 = scalar_lea.sflag [#allocation3], %s312
        %s314 = sand.u32 %s34, 1
        %s315 = smul.addr %s314, 8
        %s316 = scalar_lea.vmem [#allocation2], %s315
        %p317 = pneg %p47
        %p318 = pneg %p44
        %p319 = pneg %p68
        %p320 = pneg %p65
        %p321 = pneg %p89
        %p322 = pneg %p86
        %p323 = pneg %p110
        %p324 = pneg %p107
        %p325 = pneg %p131
        %p326 = pneg %p128
        %p327 = pneg %p152
        %p328 = pneg %p149
        %p329 = pneg %p173
        %p330 = pneg %p170
        %p331 = pneg %p199
        %p332 = pneg %p196
        %s333 = sand.u32 %s186, 1
        %s334 = scalar_lea.sflag [#allocation4], %s333
        %s335 = sand.u32 %s186, 1
        %s336 = smul.addr %s335, 8
        %s337 = scalar_lea.vmem [#allocation10], %s336
        %v339 = vld [vmem:[%s295] sm:$0xff]
        %v340 = vld [vmem:[#allocation5] sm:$0xf]
        %v341 = vld [vmem:[#allocation5 + $0x4] sm:$0xf]
        %v342 = vld [vmem:[#allocation5 + $0x8] sm:$0xf]
        %v343 = vld [vmem:[#allocation5 + $0xc] sm:$0xf]
        %v344 = vld [vmem:[%s2] sm:$0x1]
        %v345 = vpack.c.bf16 %v339, %v339
        %v347 = vlaneseq
        %v348 = vshrl.u32 %v347, 7
        %v349 = vsub.s32 0, %v348
        %v350 = vrot.slane %v344, %v349
        %v356 = vunpack.c.l.b16 %v340
        %v357 = vunpack.c.l.b16 %v341
        %v358 = vunpack.c.l.b16 %v342
        %v359 = vunpack.c.l.b16 %v343
        %v360 = vpack.c.b16 %v357, %v356
        %v361 = vpack.c.b16 %v359, %v358
        %vm364 = vcmask 261120
        %v366 = vsel %vm364, %v345, 0
        %368 = vmatprep.subr.bf16.mxu0 0
        %369 = vmatpush1.bf16.msra.mxu0 0
        %370 = vmatprep.subr.bf16.mxu0 0
        %371 = vmatpush1.bf16.msra.mxu0 0
        %372 = vmatprep.subr.bf16.mxu0 0
        %373 = vmatpush1.bf16.msra.mxu0 0
        %374 = vmatprep.subr.bf16.mxu0 0
        %375 = vmatpush1.bf16.msra.mxu0 0
        %376 = vmatprep.subr.bf16.mxu0 0
        %377 = vmatpush1.bf16.msra.mxu0 0
        %378 = vmatprep.subr.bf16.mxu0 0
        %379 = vmatpush1.bf16.msra.mxu0 0
        %380 = vmatprep.subr.bf16.mxu0 0
        %381 = vmatpush1.bf16.msra.mxu0 %v361
        %382 = vmatprep.subr.bf16.mxu0 0
        %383 = vmatpush1.bf16.msra.mxu0 %v360
        %384 = vmatprep.subr.bf16.mxu0 0
        %385 = vmatpush2.bf16.msra.mxu0 0
        %386 = vmatprep.subr.bf16.mxu0 0
        %387 = vmatpush2.bf16.msra.mxu0 0
        %388 = vmatprep.subr.bf16.mxu0 0
        %389 = vmatpush2.bf16.msra.mxu0 0
        %390 = vmatprep.subr.bf16.mxu0 0
        %391 = vmatpush2.bf16.msra.mxu0 0
        %392 = vmatprep.subr.bf16.mxu0 0
        %393 = vmatpush2.bf16.msra.mxu0 0
        %394 = vmatprep.subr.bf16.mxu0 0
        %395 = vmatpush2.bf16.msra.mxu0 0
        %396 = vmatprep.subr.bf16.mxu0 0
        %397 = vmatpush2.bf16.msra.mxu0 0
        %398 = vmatprep.subr.bf16.mxu0 0
        %399 = vmatpush2.bf16.msra.mxu0 0
        %400 = vmatprep.mubr.bf16.mxu0 0
        %401 = vmatmul.mubr.bf16.gmra.mxu0 %v366
        %v402 = vpop.f32.mrf.mxu0
        %v403 = vadd.f32 %v350, %v402
        %v404 = vpop.f32.mrf.mxu0
        %v405 = vpop.f32.mrf.mxu0
        %v406 = vpop.f32.mrf.mxu0
        %407 = vdwg.mxu0
        %v408 = vmax.f32 %v403, 0.0
        %v409 = vld [vmem:[#allocation7] sm:$0xf]
        %v410 = vld [vmem:[#allocation7 + $0x4] sm:$0xf]
        %v411 = vld [vmem:[#allocation7 + $0x8] sm:$0xf]
        %v412 = vld [vmem:[#allocation7 + $0xc] sm:$0xf]
        %v413 = vld [vmem:[#allocation7 + $0x10] sm:$0xf]
        %v414 = vld [vmem:[#allocation7 + $0x14] sm:$0xf]
        %v415 = vld [vmem:[#allocation7 + $0x18] sm:$0xf]
        %v416 = vld [vmem:[#allocation7 + $0x1c] sm:$0xf]
        %v417 = vld [vmem:[#allocation7 + $0x20] sm:$0xf]
        %v418 = vld [vmem:[#allocation7 + $0x24] sm:$0xf]
        %v419 = vld [vmem:[#allocation7 + $0x28] sm:$0xf]
        %v420 = vld [vmem:[#allocation7 + $0x2c] sm:$0xf]
        %v421 = vld [vmem:[#allocation7 + $0x30] sm:$0xf]
        %v422 = vld [vmem:[#allocation7 + $0x34] sm:$0xf]
        %v423 = vld [vmem:[#allocation7 + $0x38] sm:$0xf]
        %v424 = vld [vmem:[#allocation7 + $0x3c] sm:$0xf]
        %v425 = vld [vmem:[%s4] sm:$0x1]
        %v426 = vpack.c.bf16 %v408, %v408
        %v428 = vlaneseq
        %v429 = vshrl.u32 %v428, 7
        %v430 = vsub.s32 0, %v429
        %v431 = vrot.slane %v425, %v430
        %v449 = vunpack.c.l.b16 %v409
        %v450 = vunpack.c.l.b16 %v410
        %v451 = vunpack.c.l.b16 %v411
        %v452 = vunpack.c.l.b16 %v412
        %v453 = vunpack.c.l.b16 %v413
        %v454 = vunpack.c.l.b16 %v414
        %v455 = vunpack.c.l.b16 %v415
        %v456 = vunpack.c.l.b16 %v416
        %v457 = vunpack.c.l.b16 %v417
        %v458 = vunpack.c.l.b16 %v418
        %v459 = vunpack.c.l.b16 %v419
        %v460 = vunpack.c.l.b16 %v420
        %v461 = vunpack.c.l.b16 %v421
        %v462 = vunpack.c.l.b16 %v422
        %v463 = vunpack.c.l.b16 %v423
        %v464 = vunpack.c.l.b16 %v424
        %v465 = vpack.c.b16 %v450, %v449
        %v466 = vpack.c.b16 %v452, %v451
        %v467 = vpack.c.b16 %v454, %v453
        %v468 = vpack.c.b16 %v456, %v455
        %v469 = vpack.c.b16 %v458, %v457
        %v470 = vpack.c.b16 %v460, %v459
        %v471 = vpack.c.b16 %v462, %v461
        %v472 = vpack.c.b16 %v464, %v463
        %481 = vmatprep.subr.bf16.mxu0 0
        %482 = vmatpush1.bf16.msra.mxu0 %v472
        %483 = vmatprep.subr.bf16.mxu0 0
        %484 = vmatpush1.bf16.msra.mxu0 %v471
        %485 = vmatprep.subr.bf16.mxu0 0
        %486 = vmatpush1.bf16.msra.mxu0 %v470
        %487 = vmatprep.subr.bf16.mxu0 0
        %488 = vmatpush1.bf16.msra.mxu0 %v469
        %489 = vmatprep.subr.bf16.mxu0 0
        %490 = vmatpush1.bf16.msra.mxu0 %v468
        %491 = vmatprep.subr.bf16.mxu0 0
        %492 = vmatpush1.bf16.msra.mxu0 %v467
        %493 = vmatprep.subr.bf16.mxu0 0
        %494 = vmatpush1.bf16.msra.mxu0 %v466
        %495 = vmatprep.subr.bf16.mxu0 0
        %496 = vmatpush1.bf16.msra.mxu0 %v465
        %497 = vmatprep.subr.bf16.mxu0 0
        %498 = vmatpush2.bf16.msra.mxu0 0
        %499 = vmatprep.subr.bf16.mxu0 0
        %500 = vmatpush2.bf16.msra.mxu0 0
        %501 = vmatprep.subr.bf16.mxu0 0
        %502 = vmatpush2.bf16.msra.mxu0 0
        %503 = vmatprep.subr.bf16.mxu0 0
        %504 = vmatpush2.bf16.msra.mxu0 0
        %505 = vmatprep.subr.bf16.mxu0 0
        %506 = vmatpush2.bf16.msra.mxu0 0
        %507 = vmatprep.subr.bf16.mxu0 0
        %508 = vmatpush2.bf16.msra.mxu0 0
        %509 = vmatprep.subr.bf16.mxu0 0
        %510 = vmatpush2.bf16.msra.mxu0 0
        %511 = vmatprep.subr.bf16.mxu0 0
        %512 = vmatpush2.bf16.msra.mxu0 0
        %513 = vmatprep.mubr.bf16.mxu0 0
        %514 = vmatmul.mubr.bf16.gmra.mxu0 %v426
        %v515 = vpop.f32.mrf.mxu0
        %v516 = vadd.f32 %v431, %v515
        %v517 = vpop.f32.mrf.mxu0
        %v518 = vpop.f32.mrf.mxu0
        %v519 = vpop.f32.mrf.mxu0
        %520 = vdwg.mxu0
        %v521 = vmax.f32 %v516, 0.0
        %v522 = vld [vmem:[#allocation8] sm:$0xf]
        %v523 = vld [vmem:[#allocation8 + $0x4] sm:$0xf]
        %v524 = vld [vmem:[#allocation8 + $0x8] sm:$0xf]
        %v525 = vld [vmem:[#allocation8 + $0xc] sm:$0xf]
        %v526 = vld [vmem:[#allocation8 + $0x10] sm:$0xf]
        %v527 = vld [vmem:[#allocation8 + $0x14] sm:$0xf]
        %v528 = vld [vmem:[#allocation8 + $0x18] sm:$0xf]
        %v529 = vld [vmem:[#allocation8 + $0x1c] sm:$0xf]
        %v530 = vld [vmem:[#allocation8 + $0x20] sm:$0xf]
        %v531 = vld [vmem:[#allocation8 + $0x24] sm:$0xf]
        %v532 = vld [vmem:[#allocation8 + $0x28] sm:$0xf]
        %v533 = vld [vmem:[#allocation8 + $0x2c] sm:$0xf]
        %v534 = vld [vmem:[#allocation8 + $0x30] sm:$0xf]
        %v535 = vld [vmem:[#allocation8 + $0x34] sm:$0xf]
        %v536 = vld [vmem:[#allocation8 + $0x38] sm:$0xf]
        %v537 = vld [vmem:[#allocation8 + $0x3c] sm:$0xf]
        %v538 = vld [vmem:[%s6] sm:$0x1]
        %v539 = vpack.c.bf16 %v521, %v521
        %v541 = vlaneseq
        %v542 = vshrl.u32 %v541, 7
        %v543 = vsub.s32 0, %v542
        %v544 = vrot.slane %v538, %v543
        %v562 = vunpack.c.l.b16 %v522
        %v563 = vunpack.c.l.b16 %v523
        %v564 = vunpack.c.l.b16 %v524
        %v565 = vunpack.c.l.b16 %v525
        %v566 = vunpack.c.l.b16 %v526
        %v567 = vunpack.c.l.b16 %v527
        %v568 = vunpack.c.l.b16 %v528
        %v569 = vunpack.c.l.b16 %v529
        %v570 = vunpack.c.l.b16 %v530
        %v571 = vunpack.c.l.b16 %v531
        %v572 = vunpack.c.l.b16 %v532
        %v573 = vunpack.c.l.b16 %v533
        %v574 = vunpack.c.l.b16 %v534
        %v575 = vunpack.c.l.b16 %v535
        %v576 = vunpack.c.l.b16 %v536
        %v577 = vunpack.c.l.b16 %v537
        %v578 = vpack.c.b16 %v563, %v562
        %v579 = vpack.c.b16 %v565, %v564
        %v580 = vpack.c.b16 %v567, %v566
        %v581 = vpack.c.b16 %v569, %v568
        %v582 = vpack.c.b16 %v571, %v570
        %v583 = vpack.c.b16 %v573, %v572
        %v584 = vpack.c.b16 %v575, %v574
        %v585 = vpack.c.b16 %v577, %v576
        %594 = vmatprep.subr.bf16.mxu0 0
        %595 = vmatpush1.bf16.msra.mxu0 %v585
        %596 = vmatprep.subr.bf16.mxu0 0
        %597 = vmatpush1.bf16.msra.mxu0 %v584
        %598 = vmatprep.subr.bf16.mxu0 0
        %599 = vmatpush1.bf16.msra.mxu0 %v583
        %600 = vmatprep.subr.bf16.mxu0 0
        %601 = vmatpush1.bf16.msra.mxu0 %v582
        %602 = vmatprep.subr.bf16.mxu0 0
        %603 = vmatpush1.bf16.msra.mxu0 %v581
        %604 = vmatprep.subr.bf16.mxu0 0
        %605 = vmatpush1.bf16.msra.mxu0 %v580
        %606 = vmatprep.subr.bf16.mxu0 0
        %607 = vmatpush1.bf16.msra.mxu0 %v579
        %608 = vmatprep.subr.bf16.mxu0 0
        %609 = vmatpush1.bf16.msra.mxu0 %v578
        %610 = vmatprep.subr.bf16.mxu0 0
        %611 = vmatpush2.bf16.msra.mxu0 0
        %612 = vmatprep.subr.bf16.mxu0 0
        %613 = vmatpush2.bf16.msra.mxu0 0
        %614 = vmatprep.subr.bf16.mxu0 0
        %615 = vmatpush2.bf16.msra.mxu0 0
        %616 = vmatprep.subr.bf16.mxu0 0
        %617 = vmatpush2.bf16.msra.mxu0 0
        %618 = vmatprep.subr.bf16.mxu0 0
        %619 = vmatpush2.bf16.msra.mxu0 0
        %620 = vmatprep.subr.bf16.mxu0 0
        %621 = vmatpush2.bf16.msra.mxu0 0
        %622 = vmatprep.subr.bf16.mxu0 0
        %623 = vmatpush2.bf16.msra.mxu0 0
        %624 = vmatprep.subr.bf16.mxu0 0
        %625 = vmatpush2.bf16.msra.mxu0 0
        %626 = vmatprep.mubr.bf16.mxu0 0
        %627 = vmatmul.mubr.bf16.gmra.mxu0 %v539
        %v628 = vpop.f32.mrf.mxu0
        %v629 = vadd.f32 %v544, %v628
        %v630 = vpop.f32.mrf.mxu0
        %v631 = vpop.f32.mrf.mxu0
        %v632 = vpop.f32.mrf.mxu0
        %633 = vdwg.mxu0
        %634 = vst [vmem:[%s337] sm:$0xff] %v629
        %s635 = sand.u32 %s186, 1
        %s636 = scalar_lea.sflag [#allocation4], %s635
        %s637 = sand.u32 %s186, 1
        %s638 = smul.addr %s637, 8
        %s639 = scalar_lea.vmem [#allocation10], %s638
        // Predicated region
        $region65: #{tpu_custom_call.1} parent=47 // pred_check
          %p640 = pneg %p196
        $region66: #{tpu_custom_call.1} parent=47 // pred_check_branch
          %642 = sbr.rel (%p640) target = $region68
        $region67: #{tpu_custom_call.1} parent=47 // pred_region
          %s644 = ssub.s32 128, 128
          %645 = vsyncadd %s636, %s644
          %s646 = smul.addr %s26, 128
          %s647 = scalar_lea.hbm %s7, %s646
          %s649 = sshll.u32 %s639, 4
          %s650 = int_to_ptr.vmem [resolvable:$true] %s649
          %652 = dma.vmem_to_hbm [thread:$0]  %s650, 128, %s647, %s636
        $region68: #{tpu_custom_call.1} parent=47 // pred_fallthru
          _
      $region48: #{tpu_custom_call.1} parent=5 // pred_fallthru
        _
      %p653 = scmp.le.s32.totalorder 2, %s21
      // Predicated region
      $region69: #{tpu_custom_call.1} parent=5 // pred_check
        %p654 = pneg %p653
      $region70: #{tpu_custom_call.1} parent=5 // pred_check_branch
        %656 = sbr.rel (%p654) target = $region72
      $region71: #{tpu_custom_call.1} parent=5 // pred_region
        %s657 = ssub.s32 %s21, 2
        // Predicated region
        $region73: #{tpu_custom_call.1} parent=71 // pred_check
          %p658 = pneg %p202
        $region74: #{tpu_custom_call.1} parent=71 // pred_check_branch
          %660 = sbr.rel (%p658) target = $region76
        $region75: #{tpu_custom_call.1} parent=71 // pred_region
          %s661 = sand.u32 %s187, 1
          %s662 = scalar_lea.sflag [#allocation4], %s661
          %s663 = sand.u32 %s187, 1
          %s664 = smul.addr %s663, 8
          %s665 = scalar_lea.vmem [#allocation10], %s664
          %666 = dma.done %s662, 128
        $region76: #{tpu_custom_call.1} parent=71 // pred_fallthru
          _
      $region72: #{tpu_custom_call.1} parent=5 // pred_fallthru
        _
    $region6: #{tpu_custom_call.1} parent=1 // loop_footer
      %s25 = sadd.s32 1, %s21
    $region7: #{tpu_custom_call.1} parent=1 // loop_footer_branch
      %20 = sbr.rel target = $region3
    $region8: #{tpu_custom_call.1} parent=1 // loop_exit
      _
    %667 = vsyncpa [#allocation3], 1
    %s668 = scalar_lea.sflag [#allocation3], 1
    %669 = vsyncpa %s668, 1
    %670 = vsyncpa [#allocation6], 1
    %671 = vsyncpa [#allocation9], 1
    %672 = vsyncpa [#allocation4], 1
    %s673 = scalar_lea.sflag [#allocation4], 1
    %674 = vsyncpa %s673, 1

</llo_original>
